<compile_context>
chip_gen: v7x
topology: tpu7x:2x2x1
jax: 0.10.0
libtpu: 0.0.40
codegen_flags: <defaults>
</compile_context>

<pallas_src>
import jax
import jax.numpy as jnp
import numpy as np
from jax import lax
from jax.experimental import pallas as pl
from jax.experimental.pallas import tpu as pltpu

DEPTH = 3
KSIZE = 3
ROWS_PER_GROUP = 2          # r: H rows folded into the lane axis (r*W*C = 128)


def _fixup_chain_kernel(x_ref, wg_ref, bias_ref, o_ref):
    """Whole DEPTH-block residual chain for one batch block.

    x_ref   : VMEM (BB, G, L)          lane-dense activations, L = r*W*C
    wg_ref  : VMEM (DEPTH*2, 3L, L)    per-conv grand matrices (dy folded into K)
    bias_ref: VMEM (DEPTH*2, 1, L)     folded post-matmul lane biases
    o_ref   : VMEM (BB, G, L)
    """
    x = x_ref[...].astype(jnp.float32)
    BB, G, L = x.shape

    def conv3x3(a, idx):
        # Shifted super-row windows.  With r=2 the reflect-pad rows (1, H-2)
        # live inside the edge super-rows, so edge replication along G *is*
        # the reflect padding of 1 along H.
        prev = jnp.concatenate([a[:, :1, :], a[:, :G - 1, :]], axis=1)
        nxt = jnp.concatenate([a[:, 1:, :], a[:, G - 1:, :]], axis=1)
        win = jnp.concatenate([prev, a, nxt], axis=-1)           # (BB, G, 3L)
        t = jnp.dot(win.reshape(BB * G, 3 * L), wg_ref[idx],
                    preferred_element_type=jnp.float32)
        return t.reshape(BB, G, L)

    out = x
    for d in range(DEPTH):                        # static unroll over blocks
        t = conv3x3(out, 2 * d + 0)               # conv1 (b0 folded into bias)
        t = jnp.maximum(t + bias_ref[2 * d + 0], 0.0)   # +b0*Σw1+b1, relu
        t = conv3x3(t, 2 * d + 1)                 # conv2 (b2, scale folded)
        out = jnp.maximum(out + t + bias_ref[2 * d + 1], 0.0)  # +b3, residual, relu
    o_ref[...] = out.astype(o_ref.dtype)


def _build_weights(w1_oihw, w2_oihw, scalars, W, C, r=ROWS_PER_GROUP):
    """Fold everything static into per-conv matmul weights + lane biases.

    Returns
      wg  : (DEPTH*2, 3*r*W*C, r*W*C)  grand matrices.  K axis = concatenated
            [prev, cur, next] super-row windows; N axis = output super-row
            lanes.  Encodes dx taps, channel mixing, W reflection, dy
            placement and (for conv2) the fixup `scale`.
      bias: (DEPTH*2, 1, r*W*C)        post-matmul lane biases:
            conv1: b0*sum(w1)+b1    conv2: (b2*sum(w2))*scale + b3
    """
    D = w1_oihw.shape[0]
    WC = W * C
    L = r * WC

    # (D, 2, Cout, Cin, kh, kw) -> (D, 2, kh, kw, Cin, Cout), f32
    w = jnp.stack([w1_oihw, w2_oihw], axis=1)
    w = jnp.transpose(w, (0, 1, 4, 5, 3, 2)).astype(jnp.float32)

    # Static W-axis reflect-shift selection matrices (numpy, one per dx).
    shifts = []
    for dx in range(KSIZE):
        s = np.zeros((W, W), np.float32)
        for wo in range(W):
            ws = wo + dx - (KSIZE - 1) // 2
            if ws < 0:
                ws = -ws
            elif ws >= W:
                ws = 2 * W - 2 - ws
            s[ws, wo] += 1.0
        shifts.append(jnp.asarray(s))

    # Per-dy band matrices (WC, WC): dx taps + channel mixing + W reflection.
    bands = []
    for dy in range(KSIZE):
        m = None
        for dx in range(KSIZE):
            term = jnp.einsum('ij,dckl->dcikjl', shifts[dx], w[:, :, dy, dx])
            m = term if m is None else m + term
        bands.append(m.reshape(D, 2, WC, WC))

    # Grand matrices: fold the dy taps into the K axis.
    grand = jnp.zeros((D, 2, 3 * L, L), jnp.float32)
    for o in range(r):                        # output row within the super-row
        for dy in range(KSIZE):
            rel = o + dy - (KSIZE - 1) // 2   # input row relative to the group
            if rel < 0:
                blk, j = 0, rel + r           # prev window
            elif rel < r:
                blk, j = 1, rel               # current window
            else:
                blk, j = 2, rel - r           # next window
            r0 = blk * L + j * WC
            c0 = o * WC
            grand = grand.at[:, :, r0:r0 + WC, c0:c0 + WC].add(bands[dy])

    scale = scalars[:, 4].astype(jnp.float32)
    grand = grand.at[:, 1].multiply(scale[:, None, None])   # fold scale into conv2
    wg = grand.reshape(D * 2, 3 * L, L)

    # Post-matmul biases (exact: conv(x + b) == conv(x) + b*sum(w) under
    # reflect padding of a constant field).
    b0, b1, b2, b3 = (scalars[:, i].astype(jnp.float32) for i in range(4))
    rs1 = jnp.sum(w1_oihw.astype(jnp.float32), axis=(2, 3, 4))    # (D, Cout)
    rs2 = jnp.sum(w2_oihw.astype(jnp.float32), axis=(2, 3, 4))
    ba_c = b0[:, None] * rs1 + b1[:, None]                        # (D, C)
    bb_c = (b2[:, None] * rs2) * scale[:, None] + b3[:, None]     # (D, C)
    ba = jnp.tile(ba_c, (1, r * W))                               # (D, L)
    bb = jnp.tile(bb_c, (1, r * W))
    bias = jnp.stack([ba, bb], axis=1).reshape(D * 2, 1, L)
    return wg, bias


def fixup_residual_chain_lane_dense(x_bgl, wg, bias, *, batch_blocks=1):
    """Transpose-free entry point: x_bgl is already (B, H/r, r*W*C)."""
    B, G, L = x_bgl.shape
    assert B % batch_blocks == 0
    BB = B // batch_blocks
    return pl.pallas_call(
        _fixup_chain_kernel,
        out_shape=jax.ShapeDtypeStruct((B, G, L), x_bgl.dtype),
        grid_spec=pltpu.PrefetchScalarGridSpec(
            num_scalar_prefetch=0,
            grid=(batch_blocks,),
            in_specs=[
                pl.BlockSpec((BB, G, L), lambda b: (b, 0, 0)),            # x
                pl.BlockSpec((DEPTH * 2, 3 * L, L), lambda b: (0, 0, 0)),  # wg
                pl.BlockSpec((DEPTH * 2, 1, L), lambda b: (0, 0, 0)),      # bias
            ],
            out_specs=pl.BlockSpec((BB, G, L), lambda b: (b, 0, 0)),
        ),
        compiler_params=pltpu.CompilerParams(
            dimension_semantics=("parallel",)),
    )(x_bgl, wg, bias)


def fixup_residual_chain(x_nchw, w1_oihw, w2_oihw, scalars, *, batch_blocks=1):
    """x_nchw: (B,C,H,W); w*_oihw: (DEPTH,C,C,3,3);
    scalars: (DEPTH,5) = [bias0,bias1,bias2,bias3,scale] per residual block."""
    B, C, H, W = x_nchw.shape
    r = ROWS_PER_GROUP
    assert H % r == 0 and H >= 2 and W >= 2, "needs even H>=2, W>=2"
    assert w1_oihw.shape[0] == DEPTH and w2_oihw.shape[0] == DEPTH
    assert scalars.shape == (DEPTH, 5)
    G = H // r
    L = r * W * C

    wg, bias = _build_weights(w1_oihw, w2_oihw, scalars, W, C, r)

    # NCHW -> lane-dense (B, H/r, r*W*C).  Kept in the wrapper only because the
    # reference module is NCHW; a lane-dense/NHWC caller should call
    # fixup_residual_chain_lane_dense directly and skip both transposes.
    x = jnp.transpose(x_nchw, (0, 2, 3, 1)).reshape(B, G, L)
    out = fixup_residual_chain_lane_dense(x, wg, bias, batch_blocks=batch_blocks)
    return jnp.transpose(out.reshape(B, H, W, C), (0, 3, 1, 2))


def _ref_forward(x_nchw, w1_oihw, w2_oihw, scalars):
    """Pure-JAX reference of FixupResidualChain.forward (for verification)."""
    def conv_reflect(t, w):
        t = jnp.pad(t, ((0, 0), (0, 0), (1, 1), (1, 1)), mode="reflect")
        return lax.conv_general_dilated(
            t, w, window_strides=(1, 1), padding="VALID",
            dimension_numbers=("NCHW", "OIHW", "NCHW"))

    out = x_nchw
    for d in range(DEPTH):
        b0, b1, b2, b3, sc = (scalars[d, i] for i in range(5))
        identity = out
        t = out + b0
        t = conv_reflect(t, w1_oihw[d])
        t = jnp.maximum(t + b1, 0.0) + b2
        t = conv_reflect(t, w2_oihw[d])
        t = t * sc + b3
        out = jnp.maximum(identity + t, 0.0)
    return out


if __name__ == "__main__":
    B, C, H, W = 2, 4, 16, 16
    key = jax.random.PRNGKey(0)
    k1, k2, kx = jax.random.split(key, 3)

    # Fixup init: conv1 ~ N(0, sqrt(2/(Cout*k*k)) * depth^-0.5).
    std = float(np.sqrt(2.0 / (C * KSIZE * KSIZE)) * DEPTH ** (-0.5))
    w1 = std * jax.random.normal(k1, (DEPTH, C, C, KSIZE, KSIZE), jnp.float32)
    # NOTE: the PyTorch module zero-inits conv2 weights; we use small non-zero
    # values so the whole residual path is exercised.
    w2 = (0.1 * std) * jax.random.normal(k2, (DEPTH, C, C, KSIZE, KSIZE), jnp.float32)
    scalars = jnp.stack([
        jnp.array([0.01 * d, 0.02 * d, -0.01 * d, 0.03 * d, 1.0 + 0.1 * d],
                  dtype=jnp.float32)
        for d in range(DEPTH)
    ])
    x = jax.random.normal(kx, (B, C, H, W), jnp.float32)

    out = fixup_residual_chain(x, w1, w2, scalars)
    out = jax.block_until_ready(out)

    ref = _ref_forward(x, w1, w2, scalars)
    np.testing.assert_allclose(np.asarray(out), np.asarray(ref),
                               rtol=1e-5, atol=1e-5)
    print("KERNEL_OK")
</pallas_src>

<mosaic_0001>
module attributes {stable_mosaic.version = 11 : i64} {
  func.func @_fixup_chain_kernel(%arg0: i32, %arg1: memref<2x8x128xf32, #tpu.memory_space<vmem>>, %arg2: memref<6x384x128xf32, #tpu.memory_space<vmem>>, %arg3: memref<6x1x128xf32, #tpu.memory_space<vmem>>, %arg4: memref<2x8x128xf32, #tpu.memory_space<vmem>>) attributes {dimension_semantics = [#tpu.dimension_semantics<parallel>], iteration_bounds = array<i64: 1>, scalar_prefetch = 0 : i64, scratch_operands = 0 : i64, tpu.core_type = #tpu.core_type<tc>, window_params = [{transform_indices = @transform_0, window_bounds = array<i64: 2, 8, 128>}, {pipeline_mode = #tpu.pipeline_mode<synchronous>, transform_indices = @transform_1, window_bounds = array<i64: 6, 384, 128>}, {pipeline_mode = #tpu.pipeline_mode<synchronous>, transform_indices = @transform_2, window_bounds = array<i64: 6, 1, 128>}, {transform_indices = @transform_3, window_bounds = array<i64: 2, 8, 128>}]} {
    %c0 = arith.constant 0 : index
    %c0_0 = arith.constant 0 : index
    %c0_1 = arith.constant 0 : index
    %0 = vector.load %arg1[%c0, %c0_0, %c0_1] : memref<2x8x128xf32, #tpu.memory_space<vmem>>, vector<2x8x128xf32>
    %1 = vector.extract_strided_slice %0 {offsets = [0, 0, 0], sizes = [2, 1, 128], strides = [1, 1, 1]} : vector<2x8x128xf32> to vector<2x1x128xf32>
    %2 = vector.extract_strided_slice %0 {offsets = [0, 0, 0], sizes = [2, 7, 128], strides = [1, 1, 1]} : vector<2x8x128xf32> to vector<2x7x128xf32>
    %3 = tpu.concatenate %1, %2 in 1 : vector<2x1x128xf32>, vector<2x7x128xf32> -> vector<2x8x128xf32>
    %4 = vector.extract_strided_slice %0 {offsets = [0, 1, 0], sizes = [2, 7, 128], strides = [1, 1, 1]} : vector<2x8x128xf32> to vector<2x7x128xf32>
    %5 = vector.extract_strided_slice %0 {offsets = [0, 7, 0], sizes = [2, 1, 128], strides = [1, 1, 1]} : vector<2x8x128xf32> to vector<2x1x128xf32>
    %6 = tpu.concatenate %4, %5 in 1 : vector<2x7x128xf32>, vector<2x1x128xf32> -> vector<2x8x128xf32>
    %7 = tpu.concatenate %3, %0, %6 in 2 : vector<2x8x128xf32>, vector<2x8x128xf32>, vector<2x8x128xf32> -> vector<2x8x384xf32>
    %8 = vector.shape_cast %7 : vector<2x8x384xf32> to vector<16x384xf32>
    %c0_2 = arith.constant 0 : index
    %c0_3 = arith.constant 0 : index
    %c0_4 = arith.constant 0 : index
    %9 = vector.load %arg2[%c0_2, %c0_3, %c0_4] : memref<6x384x128xf32, #tpu.memory_space<vmem>>, vector<1x384x128xf32>
    %10 = vector.shape_cast %9 : vector<1x384x128xf32> to vector<384x128xf32>
    %cst = arith.constant dense<0.000000e+00> : vector<16x128xf32>
    %11 = tpu.matmul %8, %10, %cst {dimension_numbers = #tpu.dot_dimension_numbers<[1], [0], [0], [1], [0, 0, 1, 1], [], []>} : vector<16x384xf32>, vector<384x128xf32>, vector<16x128xf32> -> vector<16x128xf32>
    %12 = vector.shape_cast %11 : vector<16x128xf32> to vector<2x8x128xf32>
    %c0_5 = arith.constant 0 : index
    %c0_6 = arith.constant 0 : index
    %c0_7 = arith.constant 0 : index
    %13 = vector.load %arg3[%c0_5, %c0_6, %c0_7] : memref<6x1x128xf32, #tpu.memory_space<vmem>>, vector<1x1x128xf32>
    %14 = vector.shape_cast %13 : vector<1x1x128xf32> to vector<1x128xf32>
    %15 = vector.shape_cast %14 : vector<1x128xf32> to vector<1x1x128xf32>
    %16 = vector.broadcast %15 : vector<1x1x128xf32> to vector<2x8x128xf32>
    %17 = arith.addf %12, %16 : vector<2x8x128xf32>
    %cst_8 = arith.constant 0.000000e+00 : f32
    %18 = vector.broadcast %cst_8 : f32 to vector<2x8x128xf32>
    %19 = arith.maximumf %17, %18 : vector<2x8x128xf32>
    %20 = vector.extract_strided_slice %19 {offsets = [0, 0, 0], sizes = [2, 1, 128], strides = [1, 1, 1]} : vector<2x8x128xf32> to vector<2x1x128xf32>
    %21 = vector.extract_strided_slice %19 {offsets = [0, 0, 0], sizes = [2, 7, 128], strides = [1, 1, 1]} : vector<2x8x128xf32> to vector<2x7x128xf32>
    %22 = tpu.concatenate %20, %21 in 1 : vector<2x1x128xf32>, vector<2x7x128xf32> -> vector<2x8x128xf32>
    %23 = vector.extract_strided_slice %19 {offsets = [0, 1, 0], sizes = [2, 7, 128], strides = [1, 1, 1]} : vector<2x8x128xf32> to vector<2x7x128xf32>
    %24 = vector.extract_strided_slice %19 {offsets = [0, 7, 0], sizes = [2, 1, 128], strides = [1, 1, 1]} : vector<2x8x128xf32> to vector<2x1x128xf32>
    %25 = tpu.concatenate %23, %24 in 1 : vector<2x7x128xf32>, vector<2x1x128xf32> -> vector<2x8x128xf32>
    %26 = tpu.concatenate %22, %19, %25 in 2 : vector<2x8x128xf32>, vector<2x8x128xf32>, vector<2x8x128xf32> -> vector<2x8x384xf32>
    %27 = vector.shape_cast %26 : vector<2x8x384xf32> to vector<16x384xf32>
    %c1 = arith.constant 1 : index
    %c0_9 = arith.constant 0 : index
    %c0_10 = arith.constant 0 : index
    %28 = vector.load %arg2[%c1, %c0_9, %c0_10] : memref<6x384x128xf32, #tpu.memory_space<vmem>>, vector<1x384x128xf32>
    %29 = vector.shape_cast %28 : vector<1x384x128xf32> to vector<384x128xf32>
    %cst_11 = arith.constant dense<0.000000e+00> : vector<16x128xf32>
    %30 = tpu.matmul %27, %29, %cst_11 {dimension_numbers = #tpu.dot_dimension_numbers<[1], [0], [0], [1], [0, 0, 1, 1], [], []>} : vector<16x384xf32>, vector<384x128xf32>, vector<16x128xf32> -> vector<16x128xf32>
    %31 = vector.shape_cast %30 : vector<16x128xf32> to vector<2x8x128xf32>
    %32 = arith.addf %0, %31 : vector<2x8x128xf32>
    %c1_12 = arith.constant 1 : index
    %c0_13 = arith.constant 0 : index
    %c0_14 = arith.constant 0 : index
    %33 = vector.load %arg3[%c1_12, %c0_13, %c0_14] : memref<6x1x128xf32, #tpu.memory_space<vmem>>, vector<1x1x128xf32>
    %34 = vector.shape_cast %33 : vector<1x1x128xf32> to vector<1x128xf32>
    %35 = vector.shape_cast %34 : vector<1x128xf32> to vector<1x1x128xf32>
    %36 = vector.broadcast %35 : vector<1x1x128xf32> to vector<2x8x128xf32>
    %37 = arith.addf %32, %36 : vector<2x8x128xf32>
    %cst_15 = arith.constant 0.000000e+00 : f32
    %38 = vector.broadcast %cst_15 : f32 to vector<2x8x128xf32>
    %39 = arith.maximumf %37, %38 : vector<2x8x128xf32>
    %40 = vector.extract_strided_slice %39 {offsets = [0, 0, 0], sizes = [2, 1, 128], strides = [1, 1, 1]} : vector<2x8x128xf32> to vector<2x1x128xf32>
    %41 = vector.extract_strided_slice %39 {offsets = [0, 0, 0], sizes = [2, 7, 128], strides = [1, 1, 1]} : vector<2x8x128xf32> to vector<2x7x128xf32>
    %42 = tpu.concatenate %40, %41 in 1 : vector<2x1x128xf32>, vector<2x7x128xf32> -> vector<2x8x128xf32>
    %43 = vector.extract_strided_slice %39 {offsets = [0, 1, 0], sizes = [2, 7, 128], strides = [1, 1, 1]} : vector<2x8x128xf32> to vector<2x7x128xf32>
    %44 = vector.extract_strided_slice %39 {offsets = [0, 7, 0], sizes = [2, 1, 128], strides = [1, 1, 1]} : vector<2x8x128xf32> to vector<2x1x128xf32>
    %45 = tpu.concatenate %43, %44 in 1 : vector<2x7x128xf32>, vector<2x1x128xf32> -> vector<2x8x128xf32>
    %46 = tpu.concatenate %42, %39, %45 in 2 : vector<2x8x128xf32>, vector<2x8x128xf32>, vector<2x8x128xf32> -> vector<2x8x384xf32>
    %47 = vector.shape_cast %46 : vector<2x8x384xf32> to vector<16x384xf32>
    %c2 = arith.constant 2 : index
    %c0_16 = arith.constant 0 : index
    %c0_17 = arith.constant 0 : index
    %48 = vector.load %arg2[%c2, %c0_16, %c0_17] : memref<6x384x128xf32, #tpu.memory_space<vmem>>, vector<1x384x128xf32>
    %49 = vector.shape_cast %48 : vector<1x384x128xf32> to vector<384x128xf32>
    %cst_18 = arith.constant dense<0.000000e+00> : vector<16x128xf32>
    %50 = tpu.matmul %47, %49, %cst_18 {dimension_numbers = #tpu.dot_dimension_numbers<[1], [0], [0], [1], [0, 0, 1, 1], [], []>} : vector<16x384xf32>, vector<384x128xf32>, vector<16x128xf32> -> vector<16x128xf32>
    %51 = vector.shape_cast %50 : vector<16x128xf32> to vector<2x8x128xf32>
    %c2_19 = arith.constant 2 : index
    %c0_20 = arith.constant 0 : index
    %c0_21 = arith.constant 0 : index
    %52 = vector.load %arg3[%c2_19, %c0_20, %c0_21] : memref<6x1x128xf32, #tpu.memory_space<vmem>>, vector<1x1x128xf32>
    %53 = vector.shape_cast %52 : vector<1x1x128xf32> to vector<1x128xf32>
    %54 = vector.shape_cast %53 : vector<1x128xf32> to vector<1x1x128xf32>
    %55 = vector.broadcast %54 : vector<1x1x128xf32> to vector<2x8x128xf32>
    %56 = arith.addf %51, %55 : vector<2x8x128xf32>
    %cst_22 = arith.constant 0.000000e+00 : f32
    %57 = vector.broadcast %cst_22 : f32 to vector<2x8x128xf32>
    %58 = arith.maximumf %56, %57 : vector<2x8x128xf32>
    %59 = vector.extract_strided_slice %58 {offsets = [0, 0, 0], sizes = [2, 1, 128], strides = [1, 1, 1]} : vector<2x8x128xf32> to vector<2x1x128xf32>
    %60 = vector.extract_strided_slice %58 {offsets = [0, 0, 0], sizes = [2, 7, 128], strides = [1, 1, 1]} : vector<2x8x128xf32> to vector<2x7x128xf32>
    %61 = tpu.concatenate %59, %60 in 1 : vector<2x1x128xf32>, vector<2x7x128xf32> -> vector<2x8x128xf32>
    %62 = vector.extract_strided_slice %58 {offsets = [0, 1, 0], sizes = [2, 7, 128], strides = [1, 1, 1]} : vector<2x8x128xf32> to vector<2x7x128xf32>
    %63 = vector.extract_strided_slice %58 {offsets = [0, 7, 0], sizes = [2, 1, 128], strides = [1, 1, 1]} : vector<2x8x128xf32> to vector<2x1x128xf32>
    %64 = tpu.concatenate %62, %63 in 1 : vector<2x7x128xf32>, vector<2x1x128xf32> -> vector<2x8x128xf32>
    %65 = tpu.concatenate %61, %58, %64 in 2 : vector<2x8x128xf32>, vector<2x8x128xf32>, vector<2x8x128xf32> -> vector<2x8x384xf32>
    %66 = vector.shape_cast %65 : vector<2x8x384xf32> to vector<16x384xf32>
    %c3 = arith.constant 3 : index
    %c0_23 = arith.constant 0 : index
    %c0_24 = arith.constant 0 : index
    %67 = vector.load %arg2[%c3, %c0_23, %c0_24] : memref<6x384x128xf32, #tpu.memory_space<vmem>>, vector<1x384x128xf32>
    %68 = vector.shape_cast %67 : vector<1x384x128xf32> to vector<384x128xf32>
    %cst_25 = arith.constant dense<0.000000e+00> : vector<16x128xf32>
    %69 = tpu.matmul %66, %68, %cst_25 {dimension_numbers = #tpu.dot_dimension_numbers<[1], [0], [0], [1], [0, 0, 1, 1], [], []>} : vector<16x384xf32>, vector<384x128xf32>, vector<16x128xf32> -> vector<16x128xf32>
    %70 = vector.shape_cast %69 : vector<16x128xf32> to vector<2x8x128xf32>
    %71 = arith.addf %39, %70 : vector<2x8x128xf32>
    %c3_26 = arith.constant 3 : index
    %c0_27 = arith.constant 0 : index
    %c0_28 = arith.constant 0 : index
    %72 = vector.load %arg3[%c3_26, %c0_27, %c0_28] : memref<6x1x128xf32, #tpu.memory_space<vmem>>, vector<1x1x128xf32>
    %73 = vector.shape_cast %72 : vector<1x1x128xf32> to vector<1x128xf32>
    %74 = vector.shape_cast %73 : vector<1x128xf32> to vector<1x1x128xf32>
    %75 = vector.broadcast %74 : vector<1x1x128xf32> to vector<2x8x128xf32>
    %76 = arith.addf %71, %75 : vector<2x8x128xf32>
    %cst_29 = arith.constant 0.000000e+00 : f32
    %77 = vector.broadcast %cst_29 : f32 to vector<2x8x128xf32>
    %78 = arith.maximumf %76, %77 : vector<2x8x128xf32>
    %79 = vector.extract_strided_slice %78 {offsets = [0, 0, 0], sizes = [2, 1, 128], strides = [1, 1, 1]} : vector<2x8x128xf32> to vector<2x1x128xf32>
    %80 = vector.extract_strided_slice %78 {offsets = [0, 0, 0], sizes = [2, 7, 128], strides = [1, 1, 1]} : vector<2x8x128xf32> to vector<2x7x128xf32>
    %81 = tpu.concatenate %79, %80 in 1 : vector<2x1x128xf32>, vector<2x7x128xf32> -> vector<2x8x128xf32>
    %82 = vector.extract_strided_slice %78 {offsets = [0, 1, 0], sizes = [2, 7, 128], strides = [1, 1, 1]} : vector<2x8x128xf32> to vector<2x7x128xf32>
    %83 = vector.extract_strided_slice %78 {offsets = [0, 7, 0], sizes = [2, 1, 128], strides = [1, 1, 1]} : vector<2x8x128xf32> to vector<2x1x128xf32>
    %84 = tpu.concatenate %82, %83 in 1 : vector<2x7x128xf32>, vector<2x1x128xf32> -> vector<2x8x128xf32>
    %85 = tpu.concatenate %81, %78, %84 in 2 : vector<2x8x128xf32>, vector<2x8x128xf32>, vector<2x8x128xf32> -> vector<2x8x384xf32>
    %86 = vector.shape_cast %85 : vector<2x8x384xf32> to vector<16x384xf32>
    %c4 = arith.constant 4 : index
    %c0_30 = arith.constant 0 : index
    %c0_31 = arith.constant 0 : index
    %87 = vector.load %arg2[%c4, %c0_30, %c0_31] : memref<6x384x128xf32, #tpu.memory_space<vmem>>, vector<1x384x128xf32>
    %88 = vector.shape_cast %87 : vector<1x384x128xf32> to vector<384x128xf32>
    %cst_32 = arith.constant dense<0.000000e+00> : vector<16x128xf32>
    %89 = tpu.matmul %86, %88, %cst_32 {dimension_numbers = #tpu.dot_dimension_numbers<[1], [0], [0], [1], [0, 0, 1, 1], [], []>} : vector<16x384xf32>, vector<384x128xf32>, vector<16x128xf32> -> vector<16x128xf32>
    %90 = vector.shape_cast %89 : vector<16x128xf32> to vector<2x8x128xf32>
    %c4_33 = arith.constant 4 : index
    %c0_34 = arith.constant 0 : index
    %c0_35 = arith.constant 0 : index
    %91 = vector.load %arg3[%c4_33, %c0_34, %c0_35] : memref<6x1x128xf32, #tpu.memory_space<vmem>>, vector<1x1x128xf32>
    %92 = vector.shape_cast %91 : vector<1x1x128xf32> to vector<1x128xf32>
    %93 = vector.shape_cast %92 : vector<1x128xf32> to vector<1x1x128xf32>
    %94 = vector.broadcast %93 : vector<1x1x128xf32> to vector<2x8x128xf32>
    %95 = arith.addf %90, %94 : vector<2x8x128xf32>
    %cst_36 = arith.constant 0.000000e+00 : f32
    %96 = vector.broadcast %cst_36 : f32 to vector<2x8x128xf32>
    %97 = arith.maximumf %95, %96 : vector<2x8x128xf32>
    %98 = vector.extract_strided_slice %97 {offsets = [0, 0, 0], sizes = [2, 1, 128], strides = [1, 1, 1]} : vector<2x8x128xf32> to vector<2x1x128xf32>
    %99 = vector.extract_strided_slice %97 {offsets = [0, 0, 0], sizes = [2, 7, 128], strides = [1, 1, 1]} : vector<2x8x128xf32> to vector<2x7x128xf32>
    %100 = tpu.concatenate %98, %99 in 1 : vector<2x1x128xf32>, vector<2x7x128xf32> -> vector<2x8x128xf32>
    %101 = vector.extract_strided_slice %97 {offsets = [0, 1, 0], sizes = [2, 7, 128], strides = [1, 1, 1]} : vector<2x8x128xf32> to vector<2x7x128xf32>
    %102 = vector.extract_strided_slice %97 {offsets = [0, 7, 0], sizes = [2, 1, 128], strides = [1, 1, 1]} : vector<2x8x128xf32> to vector<2x1x128xf32>
    %103 = tpu.concatenate %101, %102 in 1 : vector<2x7x128xf32>, vector<2x1x128xf32> -> vector<2x8x128xf32>
    %104 = tpu.concatenate %100, %97, %103 in 2 : vector<2x8x128xf32>, vector<2x8x128xf32>, vector<2x8x128xf32> -> vector<2x8x384xf32>
    %105 = vector.shape_cast %104 : vector<2x8x384xf32> to vector<16x384xf32>
    %c5 = arith.constant 5 : index
    %c0_37 = arith.constant 0 : index
    %c0_38 = arith.constant 0 : index
    %106 = vector.load %arg2[%c5, %c0_37, %c0_38] : memref<6x384x128xf32, #tpu.memory_space<vmem>>, vector<1x384x128xf32>
    %107 = vector.shape_cast %106 : vector<1x384x128xf32> to vector<384x128xf32>
    %cst_39 = arith.constant dense<0.000000e+00> : vector<16x128xf32>
    %108 = tpu.matmul %105, %107, %cst_39 {dimension_numbers = #tpu.dot_dimension_numbers<[1], [0], [0], [1], [0, 0, 1, 1], [], []>} : vector<16x384xf32>, vector<384x128xf32>, vector<16x128xf32> -> vector<16x128xf32>
    %109 = vector.shape_cast %108 : vector<16x128xf32> to vector<2x8x128xf32>
    %110 = arith.addf %78, %109 : vector<2x8x128xf32>
    %c5_40 = arith.constant 5 : index
    %c0_41 = arith.constant 0 : index
    %c0_42 = arith.constant 0 : index
    %111 = vector.load %arg3[%c5_40, %c0_41, %c0_42] : memref<6x1x128xf32, #tpu.memory_space<vmem>>, vector<1x1x128xf32>
    %112 = vector.shape_cast %111 : vector<1x1x128xf32> to vector<1x128xf32>
    %113 = vector.shape_cast %112 : vector<1x128xf32> to vector<1x1x128xf32>
    %114 = vector.broadcast %113 : vector<1x1x128xf32> to vector<2x8x128xf32>
    %115 = arith.addf %110, %114 : vector<2x8x128xf32>
    %cst_43 = arith.constant 0.000000e+00 : f32
    %116 = vector.broadcast %cst_43 : f32 to vector<2x8x128xf32>
    %117 = arith.maximumf %115, %116 : vector<2x8x128xf32>
    %c0_44 = arith.constant 0 : index
    %c0_45 = arith.constant 0 : index
    %c0_46 = arith.constant 0 : index
    %118 = vector.load %arg4[%c0_44, %c0_45, %c0_46] : memref<2x8x128xf32, #tpu.memory_space<vmem>>, vector<2x8x128xf32>
    tpu.vector_store %arg4[%c0_44, %c0_45, %c0_46], %117 {strides = array<i32>} : memref<2x8x128xf32, #tpu.memory_space<vmem>>, vector<2x8x128xf32>,
    return
  }
  func.func @transform_0(%arg0: i32) -> (i32, i32, i32) {
    %c0_i32 = arith.constant 0 : i32
    %c0_i32_0 = arith.constant 0 : i32
    %c0_i32_1 = arith.constant 0 : i32
    return %arg0, %c0_i32, %c0_i32_0 : i32, i32, i32
  }
  func.func @transform_1(%arg0: i32) -> (i32, i32, i32) {
    %c0_i32 = arith.constant 0 : i32
    %c0_i32_0 = arith.constant 0 : i32
    %c0_i32_1 = arith.constant 0 : i32
    %c0_i32_2 = arith.constant 0 : i32
    return %c0_i32, %c0_i32_0, %c0_i32_1 : i32, i32, i32
  }
  func.func @transform_2(%arg0: i32) -> (i32, i32, i32) {
    %c0_i32 = arith.constant 0 : i32
    %c0_i32_0 = arith.constant 0 : i32
    %c0_i32_1 = arith.constant 0 : i32
    %c0_i32_2 = arith.constant 0 : i32
    return %c0_i32, %c0_i32_0, %c0_i32_1 : i32, i32, i32
  }
  func.func @transform_3(%arg0: i32) -> (i32, i32, i32) {
    %c0_i32 = arith.constant 0 : i32
    %c0_i32_0 = arith.constant 0 : i32
    %c0_i32_1 = arith.constant 0 : i32
    return %arg0, %c0_i32, %c0_i32_0 : i32, i32, i32
  }
}

</mosaic_0001>

<llo_original>
// kernel: tpu_custom_call.1
$region0: #{tpu_custom_call.1}
  #allocation0 [shape = 'u32[]', space=smem, size = 0x4, offset = 0x4, fixed_abs, tag = 'smem constant byte address 0x4 - core index']
  #allocation1 [shape = 'u32[144,128]{1,0:T(1,128)}', space=vmem, size = 0x12000, scoped, tag = 'internal scratch']
  %s0 = inlined_call_operand.hbm [shape: f32[2,8,128], index: 0, kind: input, shape index: {}]
  %s1 = inlined_call_operand.hbm [shape: f32[6,384,128], index: 1, kind: input, shape index: {}]
  %s2 = inlined_call_operand.hbm [shape: f32[6,1,128], index: 2, kind: input, shape index: {}]
  %s3 = inlined_call_operand.hbm [shape: f32[2,8,128], index: 3, kind: output, shape index: {}]
  %s4 = sld [smem:[#allocation0]]
  $region34: #{tpu_custom_call.1} parent=0
    _
  %s6 = ssub.s32 1, %s4
  %s7 = scalar_select 0, %s6, %s4
  $region1: #{tpu_custom_call.1} parent=0
    #allocation2 [shape = 'u8[8192]{0}', space=vmem, size = 0x2000, scoped, tag = 'input window, operand 0, single buffered']
    #allocation3 [shape = 's32[1]{0}', space=sflag, size = 0x4, scoped, tag = 'scoped memory for tpu_custom_call.1']
    #allocation4 [shape = 's32[1]{0}', space=sflag, size = 0x4, scoped, tag = 'scoped memory for tpu_custom_call.1']
    #allocation5 [shape = 'u8[1179648]{0}', space=vmem, size = 0x120000, scoped, tag = 'input window, operand 1, single buffered']
    #allocation6 [shape = 's32[1]{0}', space=sflag, size = 0x4, scoped, tag = 'scoped memory for tpu_custom_call.1']
    #allocation7 [shape = 'u8[3072]{0}', space=vmem, size = 0xc00, scoped, tag = 'input window, operand 2, single buffered']
    #allocation8 [shape = 'u8[8192]{0}', space=vmem, size = 0x2000, scoped, tag = 'output window, operand 0, single buffered']
    %8 = vsyncpa [#allocation3], 0
    %9 = vsyncpa [#allocation6], 0
    %10 = vsyncpa [#allocation4], 0
    // Predicated region
    $region2: #{tpu_custom_call.1} parent=1 // pred_check
      _
    $region3: #{tpu_custom_call.1} parent=1 // pred_check_branch
      %12 = sbr.rel (0) target = $region5
    $region4: #{tpu_custom_call.1} parent=1 // pred_region
      %s14 = ssub.s32 256, 256
      %15 = vsyncadd [#allocation3], %s14
      %s16 = sshll.u32 [#allocation2], 4
      %s17 = int_to_ptr.vmem [resolvable:$true] %s16
      %22 = dma.hbm_to_vmem [thread:$0]  %s0, 256, %s17, [#allocation3], 128, 128, 8
    $region5: #{tpu_custom_call.1} parent=1 // pred_fallthru
      _
    // Predicated region
    $region6: #{tpu_custom_call.1} parent=1 // pred_check
      _
    $region7: #{tpu_custom_call.1} parent=1 // pred_check_branch
      %24 = sbr.rel (0) target = $region9
    $region8: #{tpu_custom_call.1} parent=1 // pred_region
      %s26 = ssub.s32 36864, 36864
      %27 = vsyncadd [#allocation6], %s26
      %s28 = sshll.u32 [#allocation5], 4
      %s29 = int_to_ptr.vmem [resolvable:$true] %s28
      %34 = dma.hbm_to_vmem [thread:$0]  %s1, 36864, %s29, [#allocation6], 128, 128, 8
    $region9: #{tpu_custom_call.1} parent=1 // pred_fallthru
      _
    // Predicated region
    $region10: #{tpu_custom_call.1} parent=1 // pred_check
      _
    $region11: #{tpu_custom_call.1} parent=1 // pred_check_branch
      %36 = sbr.rel (0) target = $region13
    $region12: #{tpu_custom_call.1} parent=1 // pred_region
      %s38 = ssub.s32 96, 96
      %39 = vsyncadd [#allocation6], %s38
      %s40 = sshll.u32 [#allocation7], 4
      %s41 = int_to_ptr.vmem [resolvable:$true] %s40
      %46 = dma.hbm_to_vmem [thread:$0]  %s2, 96, %s41, [#allocation6], 16, 16, 1
    $region13: #{tpu_custom_call.1} parent=1 // pred_fallthru
      _
    // Predicated region
    $region14: #{tpu_custom_call.1} parent=1 // pred_check
      _
    $region15: #{tpu_custom_call.1} parent=1 // pred_check_branch
      %48 = sbr.rel (0) target = $region17
    $region16: #{tpu_custom_call.1} parent=1 // pred_region
      %49 = dma.done [#allocation3], 256
    $region17: #{tpu_custom_call.1} parent=1 // pred_fallthru
      _
    // Predicated region
    $region18: #{tpu_custom_call.1} parent=1 // pred_check
      _
    $region19: #{tpu_custom_call.1} parent=1 // pred_check_branch
      %51 = sbr.rel (0) target = $region21
    $region20: #{tpu_custom_call.1} parent=1 // pred_region
      %52 = dma.done [#allocation6], 36864
    $region21: #{tpu_custom_call.1} parent=1 // pred_fallthru
      _
    // Predicated region
    $region22: #{tpu_custom_call.1} parent=1 // pred_check
      _
    $region23: #{tpu_custom_call.1} parent=1 // pred_check_branch
      %54 = sbr.rel (0) target = $region25
    $region24: #{tpu_custom_call.1} parent=1 // pred_region
      %55 = dma.done [#allocation6], 96
    $region25: #{tpu_custom_call.1} parent=1 // pred_fallthru
      _
    %v56 = vld [vmem:[#allocation2] sm:$0xff]
    %v57 = vld [vmem:[#allocation2 + $0x8] sm:$0xff]
    %v60 = vrot.slane %v56, 7
    %v61 = vrot.slane %v57, 7
    %vm64 = vcmask 1040384
    %v65 = vsel %vm64, %v56, %v60
    %v66 = vsel %vm64, %v57, %v61
    %v67 = vrot.slane %v56, 1
    %v68 = vrot.slane %v57, 1
    %vm71 = vcmask 1046528
    %v72 = vsel %vm71, %v67, %v56
    %v73 = vsel %vm71, %v68, %v57
    %v74 = vld [vmem:[#allocation5] sm:$0xff]
    %v75 = vld [vmem:[#allocation5 + $0x8] sm:$0xff]
    %v76 = vld [vmem:[#allocation5 + $0x10] sm:$0xff]
    %v77 = vld [vmem:[#allocation5 + $0x18] sm:$0xff]
    %v78 = vld [vmem:[#allocation5 + $0x20] sm:$0xff]
    %v79 = vld [vmem:[#allocation5 + $0x28] sm:$0xff]
    %v80 = vld [vmem:[#allocation5 + $0x30] sm:$0xff]
    %v81 = vld [vmem:[#allocation5 + $0x38] sm:$0xff]
    %v82 = vld [vmem:[#allocation5 + $0x40] sm:$0xff]
    %v83 = vld [vmem:[#allocation5 + $0x48] sm:$0xff]
    %v84 = vld [vmem:[#allocation5 + $0x50] sm:$0xff]
    %v85 = vld [vmem:[#allocation5 + $0x58] sm:$0xff]
    %v86 = vld [vmem:[#allocation5 + $0x60] sm:$0xff]
    %v87 = vld [vmem:[#allocation5 + $0x68] sm:$0xff]
    %v88 = vld [vmem:[#allocation5 + $0x70] sm:$0xff]
    %v89 = vld [vmem:[#allocation5 + $0x78] sm:$0xff]
    %v90 = vld [vmem:[#allocation5 + $0x80] sm:$0xff]
    %v91 = vld [vmem:[#allocation5 + $0x88] sm:$0xff]
    %v92 = vld [vmem:[#allocation5 + $0x90] sm:$0xff]
    %v93 = vld [vmem:[#allocation5 + $0x98] sm:$0xff]
    %v94 = vld [vmem:[#allocation5 + $0xa0] sm:$0xff]
    %v95 = vld [vmem:[#allocation5 + $0xa8] sm:$0xff]
    %v96 = vld [vmem:[#allocation5 + $0xb0] sm:$0xff]
    %v97 = vld [vmem:[#allocation5 + $0xb8] sm:$0xff]
    %v98 = vld [vmem:[#allocation5 + $0xc0] sm:$0xff]
    %v99 = vld [vmem:[#allocation5 + $0xc8] sm:$0xff]
    %v100 = vld [vmem:[#allocation5 + $0xd0] sm:$0xff]
    %v101 = vld [vmem:[#allocation5 + $0xd8] sm:$0xff]
    %v102 = vld [vmem:[#allocation5 + $0xe0] sm:$0xff]
    %v103 = vld [vmem:[#allocation5 + $0xe8] sm:$0xff]
    %v104 = vld [vmem:[#allocation5 + $0xf0] sm:$0xff]
    %v105 = vld [vmem:[#allocation5 + $0xf8] sm:$0xff]
    %v106 = vld [vmem:[#allocation5 + $0x100] sm:$0xff]
    %v107 = vld [vmem:[#allocation5 + $0x108] sm:$0xff]
    %v108 = vld [vmem:[#allocation5 + $0x110] sm:$0xff]
    %v109 = vld [vmem:[#allocation5 + $0x118] sm:$0xff]
    %v110 = vld [vmem:[#allocation5 + $0x120] sm:$0xff]
    %v111 = vld [vmem:[#allocation5 + $0x128] sm:$0xff]
    %v112 = vld [vmem:[#allocation5 + $0x130] sm:$0xff]
    %v113 = vld [vmem:[#allocation5 + $0x138] sm:$0xff]
    %v114 = vld [vmem:[#allocation5 + $0x140] sm:$0xff]
    %v115 = vld [vmem:[#allocation5 + $0x148] sm:$0xff]
    %v116 = vld [vmem:[#allocation5 + $0x150] sm:$0xff]
    %v117 = vld [vmem:[#allocation5 + $0x158] sm:$0xff]
    %v118 = vld [vmem:[#allocation5 + $0x160] sm:$0xff]
    %v119 = vld [vmem:[#allocation5 + $0x168] sm:$0xff]
    %v120 = vld [vmem:[#allocation5 + $0x170] sm:$0xff]
    %v121 = vld [vmem:[#allocation5 + $0x178] sm:$0xff]
    %122 = vmatprep.subr.mxu0 0.0
    %123 = vmatpush1.msra.mxu0 %v74
    %124 = vmatprep.subr.mxu0 0.0
    %125 = vmatpush1.msra.mxu0 %v75
    %126 = vmatprep.subr.mxu0 0.0
    %127 = vmatpush1.msra.mxu0 %v76
    %128 = vmatprep.subr.mxu0 0.0
    %129 = vmatpush1.msra.mxu0 %v77
    %130 = vmatprep.subr.mxu0 0.0
    %131 = vmatpush1.msra.mxu0 %v78
    %132 = vmatprep.subr.mxu0 0.0
    %133 = vmatpush1.msra.mxu0 %v79
    %134 = vmatprep.subr.mxu0 0.0
    %135 = vmatpush1.msra.mxu0 %v80
    %136 = vmatprep.subr.mxu0 0.0
    %137 = vmatpush1.msra.mxu0 %v81
    %138 = vmatprep.subr.mxu0 0.0
    %139 = vmatpush1.msra.mxu0 %v82
    %140 = vmatprep.subr.mxu0 0.0
    %141 = vmatpush1.msra.mxu0 %v83
    %142 = vmatprep.subr.mxu0 0.0
    %143 = vmatpush1.msra.mxu0 %v84
    %144 = vmatprep.subr.mxu0 0.0
    %145 = vmatpush1.msra.mxu0 %v85
    %146 = vmatprep.subr.mxu0 0.0
    %147 = vmatpush1.msra.mxu0 %v86
    %148 = vmatprep.subr.mxu0 0.0
    %149 = vmatpush1.msra.mxu0 %v87
    %150 = vmatprep.subr.mxu0 0.0
    %151 = vmatpush1.msra.mxu0 %v88
    %152 = vmatprep.subr.mxu0 0.0
    %153 = vmatpush1.msra.mxu0 %v89
    %154 = vmatprep.subr.mxu0 0.0
    %155 = vmatpush1.msra.mxu0 %v90
    %156 = vmatprep.subr.mxu0 0.0
    %157 = vmatpush1.msra.mxu0 %v91
    %158 = vmatprep.subr.mxu0 0.0
    %159 = vmatpush1.msra.mxu0 %v92
    %160 = vmatprep.subr.mxu0 0.0
    %161 = vmatpush1.msra.mxu0 %v93
    %162 = vmatprep.subr.mxu0 0.0
    %163 = vmatpush1.msra.mxu0 %v94
    %164 = vmatprep.subr.mxu0 0.0
    %165 = vmatpush1.msra.mxu0 %v95
    %166 = vmatprep.subr.mxu0 0.0
    %167 = vmatpush1.msra.mxu0 %v96
    %168 = vmatprep.subr.mxu0 0.0
    %169 = vmatpush1.msra.mxu0 %v97
    %170 = vmatprep.subr.mxu0 0.0
    %171 = vmatpush1.msra.mxu0 %v98
    %172 = vmatprep.subr.mxu0 0.0
    %173 = vmatpush1.msra.mxu0 %v99
    %174 = vmatprep.subr.mxu0 0.0
    %175 = vmatpush1.msra.mxu0 %v100
    %176 = vmatprep.subr.mxu0 0.0
    %177 = vmatpush1.msra.mxu0 %v101
    %178 = vmatprep.subr.mxu0 0.0
    %179 = vmatpush1.msra.mxu0 %v102
    %180 = vmatprep.subr.mxu0 0.0
    %181 = vmatpush1.msra.mxu0 %v103
    %182 = vmatprep.subr.mxu0 0.0
    %183 = vmatpush1.msra.mxu0 %v104
    %184 = vmatprep.subr.mxu0 0.0
    %185 = vmatpush1.msra.mxu0 %v105
    %186 = vmatprep.mubr.f32.mxu0 %v56
    %187 = vmatmul.mubr.f32.gmra.mrb[0].mxu0 %v65
    %v188 = vpop.f32.mrb[0].mxu0
    %v189 = vadd.f32 0.0, %v188
    %v190 = vpop.f32.mrb[0].mxu0
    %191 = vmatprep.mubr.f32.mxu0 %v57
    %192 = vmatmul.mubr.f32.gmra.mrb[0].mxu0 %v66
    %v193 = vpop.f32.mrb[0].mxu0
    %v194 = vadd.f32 0.0, %v193
    %v195 = vpop.f32.mrb[0].mxu0
    %196 = vdwg.mxu0
    %197 = vmatprep.subr.mxu0 0.0
    %198 = vmatpush1.msra.mxu0 %v106
    %199 = vmatprep.subr.mxu0 0.0
    %200 = vmatpush1.msra.mxu0 %v107
    %201 = vmatprep.subr.mxu0 0.0
    %202 = vmatpush1.msra.mxu0 %v108
    %203 = vmatprep.subr.mxu0 0.0
    %204 = vmatpush1.msra.mxu0 %v109
    %205 = vmatprep.subr.mxu0 0.0
    %206 = vmatpush1.msra.mxu0 %v110
    %207 = vmatprep.subr.mxu0 0.0
    %208 = vmatpush1.msra.mxu0 %v111
    %209 = vmatprep.subr.mxu0 0.0
    %210 = vmatpush1.msra.mxu0 %v112
    %211 = vmatprep.subr.mxu0 0.0
    %212 = vmatpush1.msra.mxu0 %v113
    %213 = vmatprep.subr.mxu0 0.0
    %214 = vmatpush1.msra.mxu0 %v114
    %215 = vmatprep.subr.mxu0 0.0
    %216 = vmatpush1.msra.mxu0 %v115
    %217 = vmatprep.subr.mxu0 0.0
    %218 = vmatpush1.msra.mxu0 %v116
    %219 = vmatprep.subr.mxu0 0.0
    %220 = vmatpush1.msra.mxu0 %v117
    %221 = vmatprep.subr.mxu0 0.0
    %222 = vmatpush1.msra.mxu0 %v118
    %223 = vmatprep.subr.mxu0 0.0
    %224 = vmatpush1.msra.mxu0 %v119
    %225 = vmatprep.subr.mxu0 0.0
    %226 = vmatpush1.msra.mxu0 %v120
    %227 = vmatprep.subr.mxu0 0.0
    %228 = vmatpush1.msra.mxu0 %v121
    %229 = vmatprep.subr.mxu0 0.0
    %230 = vmatpush1.msra.mxu0 0.0
    %231 = vmatprep.subr.mxu0 0.0
    %232 = vmatpush1.msra.mxu0 0.0
    %233 = vmatprep.subr.mxu0 0.0
    %234 = vmatpush1.msra.mxu0 0.0
    %235 = vmatprep.subr.mxu0 0.0
    %236 = vmatpush1.msra.mxu0 0.0
    %237 = vmatprep.subr.mxu0 0.0
    %238 = vmatpush1.msra.mxu0 0.0
    %239 = vmatprep.subr.mxu0 0.0
    %240 = vmatpush1.msra.mxu0 0.0
    %241 = vmatprep.subr.mxu0 0.0
    %242 = vmatpush1.msra.mxu0 0.0
    %243 = vmatprep.subr.mxu0 0.0
    %244 = vmatpush1.msra.mxu0 0.0
    %245 = vmatprep.subr.mxu0 0.0
    %246 = vmatpush1.msra.mxu0 0.0
    %247 = vmatprep.subr.mxu0 0.0
    %248 = vmatpush1.msra.mxu0 0.0
    %249 = vmatprep.subr.mxu0 0.0
    %250 = vmatpush1.msra.mxu0 0.0
    %251 = vmatprep.subr.mxu0 0.0
    %252 = vmatpush1.msra.mxu0 0.0
    %253 = vmatprep.subr.mxu0 0.0
    %254 = vmatpush1.msra.mxu0 0.0
    %255 = vmatprep.subr.mxu0 0.0
    %256 = vmatpush1.msra.mxu0 0.0
    %257 = vmatprep.subr.mxu0 0.0
    %258 = vmatpush1.msra.mxu0 0.0
    %259 = vmatprep.subr.mxu0 0.0
    %260 = vmatpush1.msra.mxu0 0.0
    %261 = vmatprep.mubr.f32.mxu0 0.0
    %262 = vmatmul.mubr.f32.gmra.mrb[0].mxu0 %v72
    %v263 = vpop.f32.mrb[0].mxu0
    %v264 = vadd.f32 %v189, %v263
    %v265 = vpop.f32.mrb[0].mxu0
    %266 = vmatprep.mubr.f32.mxu0 0.0
    %267 = vmatmul.mubr.f32.gmra.mrb[0].mxu0 %v73
    %v268 = vpop.f32.mrb[0].mxu0
    %v269 = vadd.f32 %v194, %v268
    %v270 = vpop.f32.mrb[0].mxu0
    %271 = vdwg.mxu0
    %v272 = vld [vmem:[#allocation7] sm:$0x1]
    %v274 = vlaneseq
    %v275 = vshrl.u32 %v274, 7
    %v276 = vsub.s32 0, %v275
    %v277 = vrot.slane %v272, %v276
    %v279 = vadd.f32 %v264, %v277
    %v280 = vadd.f32 %v269, %v277
    %v281 = vmax.f32 %v279, 0.0
    %v282 = vmax.f32 %v280, 0.0
    %v285 = vrot.slane %v281, 7
    %v286 = vrot.slane %v282, 7
    %v289 = vsel %vm64, %v281, %v285
    %v290 = vsel %vm64, %v282, %v286
    %v291 = vrot.slane %v281, 1
    %v292 = vrot.slane %v282, 1
    %v295 = vsel %vm71, %v291, %v281
    %v296 = vsel %vm71, %v292, %v282
    %s297 = scalar_lea.vmem [#allocation5], 384
    %v298 = vld [vmem:[%s297] sm:$0xff]
    %v299 = vld [vmem:[%s297 + $0x8] sm:$0xff]
    %v300 = vld [vmem:[%s297 + $0x10] sm:$0xff]
    %v301 = vld [vmem:[%s297 + $0x18] sm:$0xff]
    %v302 = vld [vmem:[%s297 + $0x20] sm:$0xff]
    %v303 = vld [vmem:[%s297 + $0x28] sm:$0xff]
    %v304 = vld [vmem:[%s297 + $0x30] sm:$0xff]
    %v305 = vld [vmem:[%s297 + $0x38] sm:$0xff]
    %v306 = vld [vmem:[%s297 + $0x40] sm:$0xff]
    %v307 = vld [vmem:[%s297 + $0x48] sm:$0xff]
    %v308 = vld [vmem:[%s297 + $0x50] sm:$0xff]
    %v309 = vld [vmem:[%s297 + $0x58] sm:$0xff]
    %v310 = vld [vmem:[%s297 + $0x60] sm:$0xff]
    %v311 = vld [vmem:[%s297 + $0x68] sm:$0xff]
    %v312 = vld [vmem:[%s297 + $0x70] sm:$0xff]
    %v313 = vld [vmem:[%s297 + $0x78] sm:$0xff]
    %v314 = vld [vmem:[%s297 + $0x80] sm:$0xff]
    %v315 = vld [vmem:[%s297 + $0x88] sm:$0xff]
    %v316 = vld [vmem:[%s297 + $0x90] sm:$0xff]
    %v317 = vld [vmem:[%s297 + $0x98] sm:$0xff]
    %v318 = vld [vmem:[%s297 + $0xa0] sm:$0xff]
    %v319 = vld [vmem:[%s297 + $0xa8] sm:$0xff]
    %v320 = vld [vmem:[%s297 + $0xb0] sm:$0xff]
    %v321 = vld [vmem:[%s297 + $0xb8] sm:$0xff]
    %v322 = vld [vmem:[%s297 + $0xc0] sm:$0xff]
    %v323 = vld [vmem:[%s297 + $0xc8] sm:$0xff]
    %v324 = vld [vmem:[%s297 + $0xd0] sm:$0xff]
    %v325 = vld [vmem:[%s297 + $0xd8] sm:$0xff]
    %v326 = vld [vmem:[%s297 + $0xe0] sm:$0xff]
    %v327 = vld [vmem:[%s297 + $0xe8] sm:$0xff]
    %v328 = vld [vmem:[%s297 + $0xf0] sm:$0xff]
    %v329 = vld [vmem:[%s297 + $0xf8] sm:$0xff]
    %v330 = vld [vmem:[%s297 + $0x100] sm:$0xff]
    %v331 = vld [vmem:[%s297 + $0x108] sm:$0xff]
    %v332 = vld [vmem:[%s297 + $0x110] sm:$0xff]
    %v333 = vld [vmem:[%s297 + $0x118] sm:$0xff]
    %v334 = vld [vmem:[%s297 + $0x120] sm:$0xff]
    %v335 = vld [vmem:[%s297 + $0x128] sm:$0xff]
    %v336 = vld [vmem:[%s297 + $0x130] sm:$0xff]
    %v337 = vld [vmem:[%s297 + $0x138] sm:$0xff]
    %v338 = vld [vmem:[%s297 + $0x140] sm:$0xff]
    %v339 = vld [vmem:[%s297 + $0x148] sm:$0xff]
    %v340 = vld [vmem:[%s297 + $0x150] sm:$0xff]
    %v341 = vld [vmem:[%s297 + $0x158] sm:$0xff]
    %v342 = vld [vmem:[%s297 + $0x160] sm:$0xff]
    %v343 = vld [vmem:[%s297 + $0x168] sm:$0xff]
    %v344 = vld [vmem:[%s297 + $0x170] sm:$0xff]
    %v345 = vld [vmem:[%s297 + $0x178] sm:$0xff]
    %346 = vmatprep.subr.mxu0 0.0
    %347 = vmatpush1.msra.mxu0 %v298
    %348 = vmatprep.subr.mxu0 0.0
    %349 = vmatpush1.msra.mxu0 %v299
    %350 = vmatprep.subr.mxu0 0.0
    %351 = vmatpush1.msra.mxu0 %v300
    %352 = vmatprep.subr.mxu0 0.0
    %353 = vmatpush1.msra.mxu0 %v301
    %354 = vmatprep.subr.mxu0 0.0
    %355 = vmatpush1.msra.mxu0 %v302
    %356 = vmatprep.subr.mxu0 0.0
    %357 = vmatpush1.msra.mxu0 %v303
    %358 = vmatprep.subr.mxu0 0.0
    %359 = vmatpush1.msra.mxu0 %v304
    %360 = vmatprep.subr.mxu0 0.0
    %361 = vmatpush1.msra.mxu0 %v305
    %362 = vmatprep.subr.mxu0 0.0
    %363 = vmatpush1.msra.mxu0 %v306
    %364 = vmatprep.subr.mxu0 0.0
    %365 = vmatpush1.msra.mxu0 %v307
    %366 = vmatprep.subr.mxu0 0.0
    %367 = vmatpush1.msra.mxu0 %v308
    %368 = vmatprep.subr.mxu0 0.0
    %369 = vmatpush1.msra.mxu0 %v309
    %370 = vmatprep.subr.mxu0 0.0
    %371 = vmatpush1.msra.mxu0 %v310
    %372 = vmatprep.subr.mxu0 0.0
    %373 = vmatpush1.msra.mxu0 %v311
    %374 = vmatprep.subr.mxu0 0.0
    %375 = vmatpush1.msra.mxu0 %v312
    %376 = vmatprep.subr.mxu0 0.0
    %377 = vmatpush1.msra.mxu0 %v313
    %378 = vmatprep.subr.mxu0 0.0
    %379 = vmatpush1.msra.mxu0 %v314
    %380 = vmatprep.subr.mxu0 0.0
    %381 = vmatpush1.msra.mxu0 %v315
    %382 = vmatprep.subr.mxu0 0.0
    %383 = vmatpush1.msra.mxu0 %v316
    %384 = vmatprep.subr.mxu0 0.0
    %385 = vmatpush1.msra.mxu0 %v317
    %386 = vmatprep.subr.mxu0 0.0
    %387 = vmatpush1.msra.mxu0 %v318
    %388 = vmatprep.subr.mxu0 0.0
    %389 = vmatpush1.msra.mxu0 %v319
    %390 = vmatprep.subr.mxu0 0.0
    %391 = vmatpush1.msra.mxu0 %v320
    %392 = vmatprep.subr.mxu0 0.0
    %393 = vmatpush1.msra.mxu0 %v321
    %394 = vmatprep.subr.mxu0 0.0
    %395 = vmatpush1.msra.mxu0 %v322
    %396 = vmatprep.subr.mxu0 0.0
    %397 = vmatpush1.msra.mxu0 %v323
    %398 = vmatprep.subr.mxu0 0.0
    %399 = vmatpush1.msra.mxu0 %v324
    %400 = vmatprep.subr.mxu0 0.0
    %401 = vmatpush1.msra.mxu0 %v325
    %402 = vmatprep.subr.mxu0 0.0
    %403 = vmatpush1.msra.mxu0 %v326
    %404 = vmatprep.subr.mxu0 0.0
    %405 = vmatpush1.msra.mxu0 %v327
    %406 = vmatprep.subr.mxu0 0.0
    %407 = vmatpush1.msra.mxu0 %v328
    %408 = vmatprep.subr.mxu0 0.0
    %409 = vmatpush1.msra.mxu0 %v329
    %410 = vmatprep.mubr.f32.mxu0 %v281
    %411 = vmatmul.mubr.f32.gmra.mrb[0].mxu0 %v289
    %v412 = vpop.f32.mrb[0].mxu0
    %v413 = vadd.f32 0.0, %v412
    %v414 = vpop.f32.mrb[0].mxu0
    %415 = vmatprep.mubr.f32.mxu0 %v282
    %416 = vmatmul.mubr.f32.gmra.mrb[0].mxu0 %v290
    %v417 = vpop.f32.mrb[0].mxu0
    %v418 = vadd.f32 0.0, %v417
    %v419 = vpop.f32.mrb[0].mxu0
    %420 = vdwg.mxu0
    %421 = vmatprep.subr.mxu0 0.0
    %422 = vmatpush1.msra.mxu0 %v330
    %423 = vmatprep.subr.mxu0 0.0
    %424 = vmatpush1.msra.mxu0 %v331
    %425 = vmatprep.subr.mxu0 0.0
    %426 = vmatpush1.msra.mxu0 %v332
    %427 = vmatprep.subr.mxu0 0.0
    %428 = vmatpush1.msra.mxu0 %v333
    %429 = vmatprep.subr.mxu0 0.0
    %430 = vmatpush1.msra.mxu0 %v334
    %431 = vmatprep.subr.mxu0 0.0
    %432 = vmatpush1.msra.mxu0 %v335
    %433 = vmatprep.subr.mxu0 0.0
    %434 = vmatpush1.msra.mxu0 %v336
    %435 = vmatprep.subr.mxu0 0.0
    %436 = vmatpush1.msra.mxu0 %v337
    %437 = vmatprep.subr.mxu0 0.0
    %438 = vmatpush1.msra.mxu0 %v338
    %439 = vmatprep.subr.mxu0 0.0
    %440 = vmatpush1.msra.mxu0 %v339
    %441 = vmatprep.subr.mxu0 0.0
    %442 = vmatpush1.msra.mxu0 %v340
    %443 = vmatprep.subr.mxu0 0.0
    %444 = vmatpush1.msra.mxu0 %v341
    %445 = vmatprep.subr.mxu0 0.0
    %446 = vmatpush1.msra.mxu0 %v342
    %447 = vmatprep.subr.mxu0 0.0
    %448 = vmatpush1.msra.mxu0 %v343
    %449 = vmatprep.subr.mxu0 0.0
    %450 = vmatpush1.msra.mxu0 %v344
    %451 = vmatprep.subr.mxu0 0.0
    %452 = vmatpush1.msra.mxu0 %v345
    %453 = vmatprep.subr.mxu0 0.0
    %454 = vmatpush1.msra.mxu0 0.0
    %455 = vmatprep.subr.mxu0 0.0
    %456 = vmatpush1.msra.mxu0 0.0
    %457 = vmatprep.subr.mxu0 0.0
    %458 = vmatpush1.msra.mxu0 0.0
    %459 = vmatprep.subr.mxu0 0.0
    %460 = vmatpush1.msra.mxu0 0.0
    %461 = vmatprep.subr.mxu0 0.0
    %462 = vmatpush1.msra.mxu0 0.0
    %463 = vmatprep.subr.mxu0 0.0
    %464 = vmatpush1.msra.mxu0 0.0
    %465 = vmatprep.subr.mxu0 0.0
    %466 = vmatpush1.msra.mxu0 0.0
    %467 = vmatprep.subr.mxu0 0.0
    %468 = vmatpush1.msra.mxu0 0.0
    %469 = vmatprep.subr.mxu0 0.0
    %470 = vmatpush1.msra.mxu0 0.0
    %471 = vmatprep.subr.mxu0 0.0
    %472 = vmatpush1.msra.mxu0 0.0
    %473 = vmatprep.subr.mxu0 0.0
    %474 = vmatpush1.msra.mxu0 0.0
    %475 = vmatprep.subr.mxu0 0.0
    %476 = vmatpush1.msra.mxu0 0.0
    %477 = vmatprep.subr.mxu0 0.0
    %478 = vmatpush1.msra.mxu0 0.0
    %479 = vmatprep.subr.mxu0 0.0
    %480 = vmatpush1.msra.mxu0 0.0
    %481 = vmatprep.subr.mxu0 0.0
    %482 = vmatpush1.msra.mxu0 0.0
    %483 = vmatprep.subr.mxu0 0.0
    %484 = vmatpush1.msra.mxu0 0.0
    %485 = vmatprep.mubr.f32.mxu0 0.0
    %486 = vmatmul.mubr.f32.gmra.mrb[0].mxu0 %v295
    %v487 = vpop.f32.mrb[0].mxu0
    %v488 = vadd.f32 %v413, %v487
    %v489 = vpop.f32.mrb[0].mxu0
    %490 = vmatprep.mubr.f32.mxu0 0.0
    %491 = vmatmul.mubr.f32.gmra.mrb[0].mxu0 %v296
    %v492 = vpop.f32.mrb[0].mxu0
    %v493 = vadd.f32 %v418, %v492
    %v494 = vpop.f32.mrb[0].mxu0
    %495 = vdwg.mxu0
    %v496 = vadd.f32 %v56, %v488
    %v497 = vadd.f32 %v57, %v493
    %s498 = scalar_lea.vmem [#allocation7], 1
    %v499 = vld [vmem:[%s498] sm:$0x1]
    %v501 = vlaneseq
    %v502 = vshrl.u32 %v501, 7
    %v503 = vsub.s32 0, %v502
    %v504 = vrot.slane %v499, %v503
    %v506 = vadd.f32 %v496, %v504
    %v507 = vadd.f32 %v497, %v504
    %v508 = vmax.f32 %v506, 0.0
    %v509 = vmax.f32 %v507, 0.0
    %v512 = vrot.slane %v508, 7
    %v513 = vrot.slane %v509, 7
    %v516 = vsel %vm64, %v508, %v512
    %v517 = vsel %vm64, %v509, %v513
    %v518 = vrot.slane %v508, 1
    %v519 = vrot.slane %v509, 1
    %v522 = vsel %vm71, %v518, %v508
    %v523 = vsel %vm71, %v519, %v509
    %s524 = scalar_lea.vmem [#allocation5], 768
    %v525 = vld [vmem:[%s524] sm:$0xff]
    %v526 = vld [vmem:[%s524 + $0x8] sm:$0xff]
    %v527 = vld [vmem:[%s524 + $0x10] sm:$0xff]
    %v528 = vld [vmem:[%s524 + $0x18] sm:$0xff]
    %v529 = vld [vmem:[%s524 + $0x20] sm:$0xff]
    %v530 = vld [vmem:[%s524 + $0x28] sm:$0xff]
    %v531 = vld [vmem:[%s524 + $0x30] sm:$0xff]
    %v532 = vld [vmem:[%s524 + $0x38] sm:$0xff]
    %v533 = vld [vmem:[%s524 + $0x40] sm:$0xff]
    %v534 = vld [vmem:[%s524 + $0x48] sm:$0xff]
    %v535 = vld [vmem:[%s524 + $0x50] sm:$0xff]
    %v536 = vld [vmem:[%s524 + $0x58] sm:$0xff]
    %v537 = vld [vmem:[%s524 + $0x60] sm:$0xff]
    %v538 = vld [vmem:[%s524 + $0x68] sm:$0xff]
    %v539 = vld [vmem:[%s524 + $0x70] sm:$0xff]
    %v540 = vld [vmem:[%s524 + $0x78] sm:$0xff]
    %v541 = vld [vmem:[%s524 + $0x80] sm:$0xff]
    %v542 = vld [vmem:[%s524 + $0x88] sm:$0xff]
    %v543 = vld [vmem:[%s524 + $0x90] sm:$0xff]
    %v544 = vld [vmem:[%s524 + $0x98] sm:$0xff]
    %v545 = vld [vmem:[%s524 + $0xa0] sm:$0xff]
    %v546 = vld [vmem:[%s524 + $0xa8] sm:$0xff]
    %v547 = vld [vmem:[%s524 + $0xb0] sm:$0xff]
    %v548 = vld [vmem:[%s524 + $0xb8] sm:$0xff]
    %v549 = vld [vmem:[%s524 + $0xc0] sm:$0xff]
    %v550 = vld [vmem:[%s524 + $0xc8] sm:$0xff]
    %v551 = vld [vmem:[%s524 + $0xd0] sm:$0xff]
    %v552 = vld [vmem:[%s524 + $0xd8] sm:$0xff]
    %v553 = vld [vmem:[%s524 + $0xe0] sm:$0xff]
    %v554 = vld [vmem:[%s524 + $0xe8] sm:$0xff]
    %v555 = vld [vmem:[%s524 + $0xf0] sm:$0xff]
    %v556 = vld [vmem:[%s524 + $0xf8] sm:$0xff]
    %v557 = vld [vmem:[%s524 + $0x100] sm:$0xff]
    %v558 = vld [vmem:[%s524 + $0x108] sm:$0xff]
    %v559 = vld [vmem:[%s524 + $0x110] sm:$0xff]
    %v560 = vld [vmem:[%s524 + $0x118] sm:$0xff]
    %v561 = vld [vmem:[%s524 + $0x120] sm:$0xff]
    %v562 = vld [vmem:[%s524 + $0x128] sm:$0xff]
    %v563 = vld [vmem:[%s524 + $0x130] sm:$0xff]
    %v564 = vld [vmem:[%s524 + $0x138] sm:$0xff]
    %v565 = vld [vmem:[%s524 + $0x140] sm:$0xff]
    %v566 = vld [vmem:[%s524 + $0x148] sm:$0xff]
    %v567 = vld [vmem:[%s524 + $0x150] sm:$0xff]
    %v568 = vld [vmem:[%s524 + $0x158] sm:$0xff]
    %v569 = vld [vmem:[%s524 + $0x160] sm:$0xff]
    %v570 = vld [vmem:[%s524 + $0x168] sm:$0xff]
    %v571 = vld [vmem:[%s524 + $0x170] sm:$0xff]
    %v572 = vld [vmem:[%s524 + $0x178] sm:$0xff]
    %573 = vmatprep.subr.mxu0 0.0
    %574 = vmatpush1.msra.mxu0 %v525
    %575 = vmatprep.subr.mxu0 0.0
    %576 = vmatpush1.msra.mxu0 %v526
    %577 = vmatprep.subr.mxu0 0.0
    %578 = vmatpush1.msra.mxu0 %v527
    %579 = vmatprep.subr.mxu0 0.0
    %580 = vmatpush1.msra.mxu0 %v528
    %581 = vmatprep.subr.mxu0 0.0
    %582 = vmatpush1.msra.mxu0 %v529
    %583 = vmatprep.subr.mxu0 0.0
    %584 = vmatpush1.msra.mxu0 %v530
    %585 = vmatprep.subr.mxu0 0.0
    %586 = vmatpush1.msra.mxu0 %v531
    %587 = vmatprep.subr.mxu0 0.0
    %588 = vmatpush1.msra.mxu0 %v532
    %589 = vmatprep.subr.mxu0 0.0
    %590 = vmatpush1.msra.mxu0 %v533
    %591 = vmatprep.subr.mxu0 0.0
    %592 = vmatpush1.msra.mxu0 %v534
    %593 = vmatprep.subr.mxu0 0.0
    %594 = vmatpush1.msra.mxu0 %v535
    %595 = vmatprep.subr.mxu0 0.0
    %596 = vmatpush1.msra.mxu0 %v536
    %597 = vmatprep.subr.mxu0 0.0
    %598 = vmatpush1.msra.mxu0 %v537
    %599 = vmatprep.subr.mxu0 0.0
    %600 = vmatpush1.msra.mxu0 %v538
    %601 = vmatprep.subr.mxu0 0.0
    %602 = vmatpush1.msra.mxu0 %v539
    %603 = vmatprep.subr.mxu0 0.0
    %604 = vmatpush1.msra.mxu0 %v540
    %605 = vmatprep.subr.mxu0 0.0
    %606 = vmatpush1.msra.mxu0 %v541
    %607 = vmatprep.subr.mxu0 0.0
    %608 = vmatpush1.msra.mxu0 %v542
    %609 = vmatprep.subr.mxu0 0.0
    %610 = vmatpush1.msra.mxu0 %v543
    %611 = vmatprep.subr.mxu0 0.0
    %612 = vmatpush1.msra.mxu0 %v544
    %613 = vmatprep.subr.mxu0 0.0
    %614 = vmatpush1.msra.mxu0 %v545
    %615 = vmatprep.subr.mxu0 0.0
    %616 = vmatpush1.msra.mxu0 %v546
    %617 = vmatprep.subr.mxu0 0.0
    %618 = vmatpush1.msra.mxu0 %v547
    %619 = vmatprep.subr.mxu0 0.0
    %620 = vmatpush1.msra.mxu0 %v548
    %621 = vmatprep.subr.mxu0 0.0
    %622 = vmatpush1.msra.mxu0 %v549
    %623 = vmatprep.subr.mxu0 0.0
    %624 = vmatpush1.msra.mxu0 %v550
    %625 = vmatprep.subr.mxu0 0.0
    %626 = vmatpush1.msra.mxu0 %v551
    %627 = vmatprep.subr.mxu0 0.0
    %628 = vmatpush1.msra.mxu0 %v552
    %629 = vmatprep.subr.mxu0 0.0
    %630 = vmatpush1.msra.mxu0 %v553
    %631 = vmatprep.subr.mxu0 0.0
    %632 = vmatpush1.msra.mxu0 %v554
    %633 = vmatprep.subr.mxu0 0.0
    %634 = vmatpush1.msra.mxu0 %v555
    %635 = vmatprep.subr.mxu0 0.0
    %636 = vmatpush1.msra.mxu0 %v556
    %637 = vmatprep.mubr.f32.mxu0 %v508
    %638 = vmatmul.mubr.f32.gmra.mrb[0].mxu0 %v516
    %v639 = vpop.f32.mrb[0].mxu0
    %v640 = vadd.f32 0.0, %v639
    %v641 = vpop.f32.mrb[0].mxu0
    %642 = vmatprep.mubr.f32.mxu0 %v509
    %643 = vmatmul.mubr.f32.gmra.mrb[0].mxu0 %v517
    %v644 = vpop.f32.mrb[0].mxu0
    %v645 = vadd.f32 0.0, %v644
    %v646 = vpop.f32.mrb[0].mxu0
    %647 = vdwg.mxu0
    %648 = vmatprep.subr.mxu0 0.0
    %649 = vmatpush1.msra.mxu0 %v557
    %650 = vmatprep.subr.mxu0 0.0
    %651 = vmatpush1.msra.mxu0 %v558
    %652 = vmatprep.subr.mxu0 0.0
    %653 = vmatpush1.msra.mxu0 %v559
    %654 = vmatprep.subr.mxu0 0.0
    %655 = vmatpush1.msra.mxu0 %v560
    %656 = vmatprep.subr.mxu0 0.0
    %657 = vmatpush1.msra.mxu0 %v561
    %658 = vmatprep.subr.mxu0 0.0
    %659 = vmatpush1.msra.mxu0 %v562
    %660 = vmatprep.subr.mxu0 0.0
    %661 = vmatpush1.msra.mxu0 %v563
    %662 = vmatprep.subr.mxu0 0.0
    %663 = vmatpush1.msra.mxu0 %v564
    %664 = vmatprep.subr.mxu0 0.0
    %665 = vmatpush1.msra.mxu0 %v565
    %666 = vmatprep.subr.mxu0 0.0
    %667 = vmatpush1.msra.mxu0 %v566
    %668 = vmatprep.subr.mxu0 0.0
    %669 = vmatpush1.msra.mxu0 %v567
    %670 = vmatprep.subr.mxu0 0.0
    %671 = vmatpush1.msra.mxu0 %v568
    %672 = vmatprep.subr.mxu0 0.0
    %673 = vmatpush1.msra.mxu0 %v569
    %674 = vmatprep.subr.mxu0 0.0
    %675 = vmatpush1.msra.mxu0 %v570
    %676 = vmatprep.subr.mxu0 0.0
    %677 = vmatpush1.msra.mxu0 %v571
    %678 = vmatprep.subr.mxu0 0.0
    %679 = vmatpush1.msra.mxu0 %v572
    %680 = vmatprep.subr.mxu0 0.0
    %681 = vmatpush1.msra.mxu0 0.0
    %682 = vmatprep.subr.mxu0 0.0
    %683 = vmatpush1.msra.mxu0 0.0
    %684 = vmatprep.subr.mxu0 0.0
    %685 = vmatpush1.msra.mxu0 0.0
    %686 = vmatprep.subr.mxu0 0.0
    %687 = vmatpush1.msra.mxu0 0.0
    %688 = vmatprep.subr.mxu0 0.0
    %689 = vmatpush1.msra.mxu0 0.0
    %690 = vmatprep.subr.mxu0 0.0
    %691 = vmatpush1.msra.mxu0 0.0
    %692 = vmatprep.subr.mxu0 0.0
    %693 = vmatpush1.msra.mxu0 0.0
    %694 = vmatprep.subr.mxu0 0.0
    %695 = vmatpush1.msra.mxu0 0.0
    %696 = vmatprep.subr.mxu0 0.0
    %697 = vmatpush1.msra.mxu0 0.0
    %698 = vmatprep.subr.mxu0 0.0
    %699 = vmatpush1.msra.mxu0 0.0
    %700 = vmatprep.subr.mxu0 0.0
    %701 = vmatpush1.msra.mxu0 0.0
    %702 = vmatprep.subr.mxu0 0.0
    %703 = vmatpush1.msra.mxu0 0.0
    %704 = vmatprep.subr.mxu0 0.0
    %705 = vmatpush1.msra.mxu0 0.0
    %706 = vmatprep.subr.mxu0 0.0
    %707 = vmatpush1.msra.mxu0 0.0
    %708 = vmatprep.subr.mxu0 0.0
    %709 = vmatpush1.msra.mxu0 0.0
    %710 = vmatprep.subr.mxu0 0.0
    %711 = vmatpush1.msra.mxu0 0.0
    %712 = vmatprep.mubr.f32.mxu0 0.0
    %713 = vmatmul.mubr.f32.gmra.mrb[0].mxu0 %v522
    %v714 = vpop.f32.mrb[0].mxu0
    %v715 = vadd.f32 %v640, %v714
    %v716 = vpop.f32.mrb[0].mxu0
    %717 = vmatprep.mubr.f32.mxu0 0.0
    %718 = vmatmul.mubr.f32.gmra.mrb[0].mxu0 %v523
    %v719 = vpop.f32.mrb[0].mxu0
    %v720 = vadd.f32 %v645, %v719
    %v721 = vpop.f32.mrb[0].mxu0
    %722 = vdwg.mxu0
    %s723 = scalar_lea.vmem [#allocation7], 2
    %v724 = vld [vmem:[%s723] sm:$0x1]
    %v726 = vlaneseq
    %v727 = vshrl.u32 %v726, 7
    %v728 = vsub.s32 0, %v727
    %v729 = vrot.slane %v724, %v728
    %v731 = vadd.f32 %v715, %v729
    %v732 = vadd.f32 %v720, %v729
    %v733 = vmax.f32 %v731, 0.0
    %v734 = vmax.f32 %v732, 0.0
    %v737 = vrot.slane %v733, 7
    %v738 = vrot.slane %v734, 7
    %v741 = vsel %vm64, %v733, %v737
    %v742 = vsel %vm64, %v734, %v738
    %v743 = vrot.slane %v733, 1
    %v744 = vrot.slane %v734, 1
    %v747 = vsel %vm71, %v743, %v733
    %v748 = vsel %vm71, %v744, %v734
    %s749 = scalar_lea.vmem [#allocation5], 1152
    %v750 = vld [vmem:[%s749] sm:$0xff]
    %v751 = vld [vmem:[%s749 + $0x8] sm:$0xff]
    %v752 = vld [vmem:[%s749 + $0x10] sm:$0xff]
    %v753 = vld [vmem:[%s749 + $0x18] sm:$0xff]
    %v754 = vld [vmem:[%s749 + $0x20] sm:$0xff]
    %v755 = vld [vmem:[%s749 + $0x28] sm:$0xff]
    %v756 = vld [vmem:[%s749 + $0x30] sm:$0xff]
    %v757 = vld [vmem:[%s749 + $0x38] sm:$0xff]
    %v758 = vld [vmem:[%s749 + $0x40] sm:$0xff]
    %v759 = vld [vmem:[%s749 + $0x48] sm:$0xff]
    %v760 = vld [vmem:[%s749 + $0x50] sm:$0xff]
    %v761 = vld [vmem:[%s749 + $0x58] sm:$0xff]
    %v762 = vld [vmem:[%s749 + $0x60] sm:$0xff]
    %v763 = vld [vmem:[%s749 + $0x68] sm:$0xff]
    %v764 = vld [vmem:[%s749 + $0x70] sm:$0xff]
    %v765 = vld [vmem:[%s749 + $0x78] sm:$0xff]
    %v766 = vld [vmem:[%s749 + $0x80] sm:$0xff]
    %v767 = vld [vmem:[%s749 + $0x88] sm:$0xff]
    %v768 = vld [vmem:[%s749 + $0x90] sm:$0xff]
    %v769 = vld [vmem:[%s749 + $0x98] sm:$0xff]
    %v770 = vld [vmem:[%s749 + $0xa0] sm:$0xff]
    %v771 = vld [vmem:[%s749 + $0xa8] sm:$0xff]
    %v772 = vld [vmem:[%s749 + $0xb0] sm:$0xff]
    %v773 = vld [vmem:[%s749 + $0xb8] sm:$0xff]
    %v774 = vld [vmem:[%s749 + $0xc0] sm:$0xff]
    %v775 = vld [vmem:[%s749 + $0xc8] sm:$0xff]
    %v776 = vld [vmem:[%s749 + $0xd0] sm:$0xff]
    %v777 = vld [vmem:[%s749 + $0xd8] sm:$0xff]
    %v778 = vld [vmem:[%s749 + $0xe0] sm:$0xff]
    %v779 = vld [vmem:[%s749 + $0xe8] sm:$0xff]
    %v780 = vld [vmem:[%s749 + $0xf0] sm:$0xff]
    %v781 = vld [vmem:[%s749 + $0xf8] sm:$0xff]
    %v782 = vld [vmem:[%s749 + $0x100] sm:$0xff]
    %v783 = vld [vmem:[%s749 + $0x108] sm:$0xff]
    %v784 = vld [vmem:[%s749 + $0x110] sm:$0xff]
    %v785 = vld [vmem:[%s749 + $0x118] sm:$0xff]
    %v786 = vld [vmem:[%s749 + $0x120] sm:$0xff]
    %v787 = vld [vmem:[%s749 + $0x128] sm:$0xff]
    %v788 = vld [vmem:[%s749 + $0x130] sm:$0xff]
    %v789 = vld [vmem:[%s749 + $0x138] sm:$0xff]
    %v790 = vld [vmem:[%s749 + $0x140] sm:$0xff]
    %v791 = vld [vmem:[%s749 + $0x148] sm:$0xff]
    %v792 = vld [vmem:[%s749 + $0x150] sm:$0xff]
    %v793 = vld [vmem:[%s749 + $0x158] sm:$0xff]
    %v794 = vld [vmem:[%s749 + $0x160] sm:$0xff]
    %v795 = vld [vmem:[%s749 + $0x168] sm:$0xff]
    %v796 = vld [vmem:[%s749 + $0x170] sm:$0xff]
    %v797 = vld [vmem:[%s749 + $0x178] sm:$0xff]
    %798 = vmatprep.subr.mxu0 0.0
    %799 = vmatpush1.msra.mxu0 %v750
    %800 = vmatprep.subr.mxu0 0.0
    %801 = vmatpush1.msra.mxu0 %v751
    %802 = vmatprep.subr.mxu0 0.0
    %803 = vmatpush1.msra.mxu0 %v752
    %804 = vmatprep.subr.mxu0 0.0
    %805 = vmatpush1.msra.mxu0 %v753
    %806 = vmatprep.subr.mxu0 0.0
    %807 = vmatpush1.msra.mxu0 %v754
    %808 = vmatprep.subr.mxu0 0.0
    %809 = vmatpush1.msra.mxu0 %v755
    %810 = vmatprep.subr.mxu0 0.0
    %811 = vmatpush1.msra.mxu0 %v756
    %812 = vmatprep.subr.mxu0 0.0
    %813 = vmatpush1.msra.mxu0 %v757
    %814 = vmatprep.subr.mxu0 0.0
    %815 = vmatpush1.msra.mxu0 %v758
    %816 = vmatprep.subr.mxu0 0.0
    %817 = vmatpush1.msra.mxu0 %v759
    %818 = vmatprep.subr.mxu0 0.0
    %819 = vmatpush1.msra.mxu0 %v760
    %820 = vmatprep.subr.mxu0 0.0
    %821 = vmatpush1.msra.mxu0 %v761
    %822 = vmatprep.subr.mxu0 0.0
    %823 = vmatpush1.msra.mxu0 %v762
    %824 = vmatprep.subr.mxu0 0.0
    %825 = vmatpush1.msra.mxu0 %v763
    %826 = vmatprep.subr.mxu0 0.0
    %827 = vmatpush1.msra.mxu0 %v764
    %828 = vmatprep.subr.mxu0 0.0
    %829 = vmatpush1.msra.mxu0 %v765
    %830 = vmatprep.subr.mxu0 0.0
    %831 = vmatpush1.msra.mxu0 %v766
    %832 = vmatprep.subr.mxu0 0.0
    %833 = vmatpush1.msra.mxu0 %v767
    %834 = vmatprep.subr.mxu0 0.0
    %835 = vmatpush1.msra.mxu0 %v768
    %836 = vmatprep.subr.mxu0 0.0
    %837 = vmatpush1.msra.mxu0 %v769
    %838 = vmatprep.subr.mxu0 0.0
    %839 = vmatpush1.msra.mxu0 %v770
    %840 = vmatprep.subr.mxu0 0.0
    %841 = vmatpush1.msra.mxu0 %v771
    %842 = vmatprep.subr.mxu0 0.0
    %843 = vmatpush1.msra.mxu0 %v772
    %844 = vmatprep.subr.mxu0 0.0
    %845 = vmatpush1.msra.mxu0 %v773
    %846 = vmatprep.subr.mxu0 0.0
    %847 = vmatpush1.msra.mxu0 %v774
    %848 = vmatprep.subr.mxu0 0.0
    %849 = vmatpush1.msra.mxu0 %v775
    %850 = vmatprep.subr.mxu0 0.0
    %851 = vmatpush1.msra.mxu0 %v776
    %852 = vmatprep.subr.mxu0 0.0
    %853 = vmatpush1.msra.mxu0 %v777
    %854 = vmatprep.subr.mxu0 0.0
    %855 = vmatpush1.msra.mxu0 %v778
    %856 = vmatprep.subr.mxu0 0.0
    %857 = vmatpush1.msra.mxu0 %v779
    %858 = vmatprep.subr.mxu0 0.0
    %859 = vmatpush1.msra.mxu0 %v780
    %860 = vmatprep.subr.mxu0 0.0
    %861 = vmatpush1.msra.mxu0 %v781
    %862 = vmatprep.mubr.f32.mxu0 %v733
    %863 = vmatmul.mubr.f32.gmra.mrb[0].mxu0 %v741
    %v864 = vpop.f32.mrb[0].mxu0
    %v865 = vadd.f32 0.0, %v864
    %v866 = vpop.f32.mrb[0].mxu0
    %867 = vmatprep.mubr.f32.mxu0 %v734
    %868 = vmatmul.mubr.f32.gmra.mrb[0].mxu0 %v742
    %v869 = vpop.f32.mrb[0].mxu0
    %v870 = vadd.f32 0.0, %v869
    %v871 = vpop.f32.mrb[0].mxu0
    %872 = vdwg.mxu0
    %873 = vmatprep.subr.mxu0 0.0
    %874 = vmatpush1.msra.mxu0 %v782
    %875 = vmatprep.subr.mxu0 0.0
    %876 = vmatpush1.msra.mxu0 %v783
    %877 = vmatprep.subr.mxu0 0.0
    %878 = vmatpush1.msra.mxu0 %v784
    %879 = vmatprep.subr.mxu0 0.0
    %880 = vmatpush1.msra.mxu0 %v785
    %881 = vmatprep.subr.mxu0 0.0
    %882 = vmatpush1.msra.mxu0 %v786
    %883 = vmatprep.subr.mxu0 0.0
    %884 = vmatpush1.msra.mxu0 %v787
    %885 = vmatprep.subr.mxu0 0.0
    %886 = vmatpush1.msra.mxu0 %v788
    %887 = vmatprep.subr.mxu0 0.0
    %888 = vmatpush1.msra.mxu0 %v789
    %889 = vmatprep.subr.mxu0 0.0
    %890 = vmatpush1.msra.mxu0 %v790
    %891 = vmatprep.subr.mxu0 0.0
    %892 = vmatpush1.msra.mxu0 %v791
    %893 = vmatprep.subr.mxu0 0.0
    %894 = vmatpush1.msra.mxu0 %v792
    %895 = vmatprep.subr.mxu0 0.0
    %896 = vmatpush1.msra.mxu0 %v793
    %897 = vmatprep.subr.mxu0 0.0
    %898 = vmatpush1.msra.mxu0 %v794
    %899 = vmatprep.subr.mxu0 0.0
    %900 = vmatpush1.msra.mxu0 %v795
    %901 = vmatprep.subr.mxu0 0.0
    %902 = vmatpush1.msra.mxu0 %v796
    %903 = vmatprep.subr.mxu0 0.0
    %904 = vmatpush1.msra.mxu0 %v797
    %905 = vmatprep.subr.mxu0 0.0
    %906 = vmatpush1.msra.mxu0 0.0
    %907 = vmatprep.subr.mxu0 0.0
    %908 = vmatpush1.msra.mxu0 0.0
    %909 = vmatprep.subr.mxu0 0.0
    %910 = vmatpush1.msra.mxu0 0.0
    %911 = vmatprep.subr.mxu0 0.0
    %912 = vmatpush1.msra.mxu0 0.0
    %913 = vmatprep.subr.mxu0 0.0
    %914 = vmatpush1.msra.mxu0 0.0
    %915 = vmatprep.subr.mxu0 0.0
    %916 = vmatpush1.msra.mxu0 0.0
    %917 = vmatprep.subr.mxu0 0.0
    %918 = vmatpush1.msra.mxu0 0.0
    %919 = vmatprep.subr.mxu0 0.0
    %920 = vmatpush1.msra.mxu0 0.0
    %921 = vmatprep.subr.mxu0 0.0
    %922 = vmatpush1.msra.mxu0 0.0
    %923 = vmatprep.subr.mxu0 0.0
    %924 = vmatpush1.msra.mxu0 0.0
    %925 = vmatprep.subr.mxu0 0.0
    %926 = vmatpush1.msra.mxu0 0.0
    %927 = vmatprep.subr.mxu0 0.0
    %928 = vmatpush1.msra.mxu0 0.0
    %929 = vmatprep.subr.mxu0 0.0
    %930 = vmatpush1.msra.mxu0 0.0
    %931 = vmatprep.subr.mxu0 0.0
    %932 = vmatpush1.msra.mxu0 0.0
    %933 = vmatprep.subr.mxu0 0.0
    %934 = vmatpush1.msra.mxu0 0.0
    %935 = vmatprep.subr.mxu0 0.0
    %936 = vmatpush1.msra.mxu0 0.0
    %937 = vmatprep.mubr.f32.mxu0 0.0
    %938 = vmatmul.mubr.f32.gmra.mrb[0].mxu0 %v747
    %v939 = vpop.f32.mrb[0].mxu0
    %v940 = vadd.f32 %v865, %v939
    %v941 = vpop.f32.mrb[0].mxu0
    %942 = vmatprep.mubr.f32.mxu0 0.0
    %943 = vmatmul.mubr.f32.gmra.mrb[0].mxu0 %v748
    %v944 = vpop.f32.mrb[0].mxu0
    %v945 = vadd.f32 %v870, %v944
    %v946 = vpop.f32.mrb[0].mxu0
    %947 = vdwg.mxu0
    %v948 = vadd.f32 %v508, %v940
    %v949 = vadd.f32 %v509, %v945
    %s950 = scalar_lea.vmem [#allocation7], 3
    %v951 = vld [vmem:[%s950] sm:$0x1]
    %v953 = vlaneseq
    %v954 = vshrl.u32 %v953, 7
    %v955 = vsub.s32 0, %v954
    %v956 = vrot.slane %v951, %v955
    %v958 = vadd.f32 %v948, %v956
    %v959 = vadd.f32 %v949, %v956
    %v960 = vmax.f32 %v958, 0.0
    %v961 = vmax.f32 %v959, 0.0
    %v964 = vrot.slane %v960, 7
    %v965 = vrot.slane %v961, 7
    %v968 = vsel %vm64, %v960, %v964
    %v969 = vsel %vm64, %v961, %v965
    %v970 = vrot.slane %v960, 1
    %v971 = vrot.slane %v961, 1
    %v974 = vsel %vm71, %v970, %v960
    %v975 = vsel %vm71, %v971, %v961
    %s976 = scalar_lea.vmem [#allocation5], 1536
    %v977 = vld [vmem:[%s976] sm:$0xff]
    %v978 = vld [vmem:[%s976 + $0x8] sm:$0xff]
    %v979 = vld [vmem:[%s976 + $0x10] sm:$0xff]
    %v980 = vld [vmem:[%s976 + $0x18] sm:$0xff]
    %v981 = vld [vmem:[%s976 + $0x20] sm:$0xff]
    %v982 = vld [vmem:[%s976 + $0x28] sm:$0xff]
    %v983 = vld [vmem:[%s976 + $0x30] sm:$0xff]
    %v984 = vld [vmem:[%s976 + $0x38] sm:$0xff]
    %v985 = vld [vmem:[%s976 + $0x40] sm:$0xff]
    %v986 = vld [vmem:[%s976 + $0x48] sm:$0xff]
    %v987 = vld [vmem:[%s976 + $0x50] sm:$0xff]
    %v988 = vld [vmem:[%s976 + $0x58] sm:$0xff]
    %v989 = vld [vmem:[%s976 + $0x60] sm:$0xff]
    %v990 = vld [vmem:[%s976 + $0x68] sm:$0xff]
    %v991 = vld [vmem:[%s976 + $0x70] sm:$0xff]
    %v992 = vld [vmem:[%s976 + $0x78] sm:$0xff]
    %v993 = vld [vmem:[%s976 + $0x80] sm:$0xff]
    %v994 = vld [vmem:[%s976 + $0x88] sm:$0xff]
    %v995 = vld [vmem:[%s976 + $0x90] sm:$0xff]
    %v996 = vld [vmem:[%s976 + $0x98] sm:$0xff]
    %v997 = vld [vmem:[%s976 + $0xa0] sm:$0xff]
    %v998 = vld [vmem:[%s976 + $0xa8] sm:$0xff]
    %v999 = vld [vmem:[%s976 + $0xb0] sm:$0xff]
    %v1000 = vld [vmem:[%s976 + $0xb8] sm:$0xff]
    %v1001 = vld [vmem:[%s976 + $0xc0] sm:$0xff]
    %v1002 = vld [vmem:[%s976 + $0xc8] sm:$0xff]
    %v1003 = vld [vmem:[%s976 + $0xd0] sm:$0xff]
    %v1004 = vld [vmem:[%s976 + $0xd8] sm:$0xff]
    %v1005 = vld [vmem:[%s976 + $0xe0] sm:$0xff]
    %v1006 = vld [vmem:[%s976 + $0xe8] sm:$0xff]
    %v1007 = vld [vmem:[%s976 + $0xf0] sm:$0xff]
    %v1008 = vld [vmem:[%s976 + $0xf8] sm:$0xff]
    %v1009 = vld [vmem:[%s976 + $0x100] sm:$0xff]
    %v1010 = vld [vmem:[%s976 + $0x108] sm:$0xff]
    %v1011 = vld [vmem:[%s976 + $0x110] sm:$0xff]
    %v1012 = vld [vmem:[%s976 + $0x118] sm:$0xff]
    %v1013 = vld [vmem:[%s976 + $0x120] sm:$0xff]
    %v1014 = vld [vmem:[%s976 + $0x128] sm:$0xff]
    %v1015 = vld [vmem:[%s976 + $0x130] sm:$0xff]
    %v1016 = vld [vmem:[%s976 + $0x138] sm:$0xff]
    %v1017 = vld [vmem:[%s976 + $0x140] sm:$0xff]
    %v1018 = vld [vmem:[%s976 + $0x148] sm:$0xff]
    %v1019 = vld [vmem:[%s976 + $0x150] sm:$0xff]
    %v1020 = vld [vmem:[%s976 + $0x158] sm:$0xff]
    %v1021 = vld [vmem:[%s976 + $0x160] sm:$0xff]
    %v1022 = vld [vmem:[%s976 + $0x168] sm:$0xff]
    %v1023 = vld [vmem:[%s976 + $0x170] sm:$0xff]
    %v1024 = vld [vmem:[%s976 + $0x178] sm:$0xff]
    %1025 = vmatprep.subr.mxu0 0.0
    %1026 = vmatpush1.msra.mxu0 %v977
    %1027 = vmatprep.subr.mxu0 0.0
    %1028 = vmatpush1.msra.mxu0 %v978
    %1029 = vmatprep.subr.mxu0 0.0
    %1030 = vmatpush1.msra.mxu0 %v979
    %1031 = vmatprep.subr.mxu0 0.0
    %1032 = vmatpush1.msra.mxu0 %v980
    %1033 = vmatprep.subr.mxu0 0.0
    %1034 = vmatpush1.msra.mxu0 %v981
    %1035 = vmatprep.subr.mxu0 0.0
    %1036 = vmatpush1.msra.mxu0 %v982
    %1037 = vmatprep.subr.mxu0 0.0
    %1038 = vmatpush1.msra.mxu0 %v983
    %1039 = vmatprep.subr.mxu0 0.0
    %1040 = vmatpush1.msra.mxu0 %v984
    %1041 = vmatprep.subr.mxu0 0.0
    %1042 = vmatpush1.msra.mxu0 %v985
    %1043 = vmatprep.subr.mxu0 0.0
    %1044 = vmatpush1.msra.mxu0 %v986
    %1045 = vmatprep.subr.mxu0 0.0
    %1046 = vmatpush1.msra.mxu0 %v987
    %1047 = vmatprep.subr.mxu0 0.0
    %1048 = vmatpush1.msra.mxu0 %v988
    %1049 = vmatprep.subr.mxu0 0.0
    %1050 = vmatpush1.msra.mxu0 %v989
    %1051 = vmatprep.subr.mxu0 0.0
    %1052 = vmatpush1.msra.mxu0 %v990
    %1053 = vmatprep.subr.mxu0 0.0
    %1054 = vmatpush1.msra.mxu0 %v991
    %1055 = vmatprep.subr.mxu0 0.0
    %1056 = vmatpush1.msra.mxu0 %v992
    %1057 = vmatprep.subr.mxu0 0.0
    %1058 = vmatpush1.msra.mxu0 %v993
    %1059 = vmatprep.subr.mxu0 0.0
    %1060 = vmatpush1.msra.mxu0 %v994
    %1061 = vmatprep.subr.mxu0 0.0
    %1062 = vmatpush1.msra.mxu0 %v995
    %1063 = vmatprep.subr.mxu0 0.0
    %1064 = vmatpush1.msra.mxu0 %v996
    %1065 = vmatprep.subr.mxu0 0.0
    %1066 = vmatpush1.msra.mxu0 %v997
    %1067 = vmatprep.subr.mxu0 0.0
    %1068 = vmatpush1.msra.mxu0 %v998
    %1069 = vmatprep.subr.mxu0 0.0
    %1070 = vmatpush1.msra.mxu0 %v999
    %1071 = vmatprep.subr.mxu0 0.0
    %1072 = vmatpush1.msra.mxu0 %v1000
    %1073 = vmatprep.subr.mxu0 0.0
    %1074 = vmatpush1.msra.mxu0 %v1001
    %1075 = vmatprep.subr.mxu0 0.0
    %1076 = vmatpush1.msra.mxu0 %v1002
    %1077 = vmatprep.subr.mxu0 0.0
    %1078 = vmatpush1.msra.mxu0 %v1003
    %1079 = vmatprep.subr.mxu0 0.0
    %1080 = vmatpush1.msra.mxu0 %v1004
    %1081 = vmatprep.subr.mxu0 0.0
    %1082 = vmatpush1.msra.mxu0 %v1005
    %1083 = vmatprep.subr.mxu0 0.0
    %1084 = vmatpush1.msra.mxu0 %v1006
    %1085 = vmatprep.subr.mxu0 0.0
    %1086 = vmatpush1.msra.mxu0 %v1007
    %1087 = vmatprep.subr.mxu0 0.0
    %1088 = vmatpush1.msra.mxu0 %v1008
    %1089 = vmatprep.mubr.f32.mxu0 %v960
    %1090 = vmatmul.mubr.f32.gmra.mrb[0].mxu0 %v968
    %v1091 = vpop.f32.mrb[0].mxu0
    %v1092 = vadd.f32 0.0, %v1091
    %v1093 = vpop.f32.mrb[0].mxu0
    %1094 = vmatprep.mubr.f32.mxu0 %v961
    %1095 = vmatmul.mubr.f32.gmra.mrb[0].mxu0 %v969
    %v1096 = vpop.f32.mrb[0].mxu0
    %v1097 = vadd.f32 0.0, %v1096
    %v1098 = vpop.f32.mrb[0].mxu0
    %1099 = vdwg.mxu0
    %1100 = vmatprep.subr.mxu0 0.0
    %1101 = vmatpush1.msra.mxu0 %v1009
    %1102 = vmatprep.subr.mxu0 0.0
    %1103 = vmatpush1.msra.mxu0 %v1010
    %1104 = vmatprep.subr.mxu0 0.0
    %1105 = vmatpush1.msra.mxu0 %v1011
    %1106 = vmatprep.subr.mxu0 0.0
    %1107 = vmatpush1.msra.mxu0 %v1012
    %1108 = vmatprep.subr.mxu0 0.0
    %1109 = vmatpush1.msra.mxu0 %v1013
    %1110 = vmatprep.subr.mxu0 0.0
    %1111 = vmatpush1.msra.mxu0 %v1014
    %1112 = vmatprep.subr.mxu0 0.0
    %1113 = vmatpush1.msra.mxu0 %v1015
    %1114 = vmatprep.subr.mxu0 0.0
    %1115 = vmatpush1.msra.mxu0 %v1016
    %1116 = vmatprep.subr.mxu0 0.0
    %1117 = vmatpush1.msra.mxu0 %v1017
    %1118 = vmatprep.subr.mxu0 0.0
    %1119 = vmatpush1.msra.mxu0 %v1018
    %1120 = vmatprep.subr.mxu0 0.0
    %1121 = vmatpush1.msra.mxu0 %v1019
    %1122 = vmatprep.subr.mxu0 0.0
    %1123 = vmatpush1.msra.mxu0 %v1020
    %1124 = vmatprep.subr.mxu0 0.0
    %1125 = vmatpush1.msra.mxu0 %v1021
    %1126 = vmatprep.subr.mxu0 0.0
    %1127 = vmatpush1.msra.mxu0 %v1022
    %1128 = vmatprep.subr.mxu0 0.0
    %1129 = vmatpush1.msra.mxu0 %v1023
    %1130 = vmatprep.subr.mxu0 0.0
    %1131 = vmatpush1.msra.mxu0 %v1024
    %1132 = vmatprep.subr.mxu0 0.0
    %1133 = vmatpush1.msra.mxu0 0.0
    %1134 = vmatprep.subr.mxu0 0.0
    %1135 = vmatpush1.msra.mxu0 0.0
    %1136 = vmatprep.subr.mxu0 0.0
    %1137 = vmatpush1.msra.mxu0 0.0
    %1138 = vmatprep.subr.mxu0 0.0
    %1139 = vmatpush1.msra.mxu0 0.0
    %1140 = vmatprep.subr.mxu0 0.0
    %1141 = vmatpush1.msra.mxu0 0.0
    %1142 = vmatprep.subr.mxu0 0.0
    %1143 = vmatpush1.msra.mxu0 0.0
    %1144 = vmatprep.subr.mxu0 0.0
    %1145 = vmatpush1.msra.mxu0 0.0
    %1146 = vmatprep.subr.mxu0 0.0
    %1147 = vmatpush1.msra.mxu0 0.0
    %1148 = vmatprep.subr.mxu0 0.0
    %1149 = vmatpush1.msra.mxu0 0.0
    %1150 = vmatprep.subr.mxu0 0.0
    %1151 = vmatpush1.msra.mxu0 0.0
    %1152 = vmatprep.subr.mxu0 0.0
    %1153 = vmatpush1.msra.mxu0 0.0
    %1154 = vmatprep.subr.mxu0 0.0
    %1155 = vmatpush1.msra.mxu0 0.0
    %1156 = vmatprep.subr.mxu0 0.0
    %1157 = vmatpush1.msra.mxu0 0.0
    %1158 = vmatprep.subr.mxu0 0.0
    %1159 = vmatpush1.msra.mxu0 0.0
    %1160 = vmatprep.subr.mxu0 0.0
    %1161 = vmatpush1.msra.mxu0 0.0
    %1162 = vmatprep.subr.mxu0 0.0
    %1163 = vmatpush1.msra.mxu0 0.0
    %1164 = vmatprep.mubr.f32.mxu0 0.0
    %1165 = vmatmul.mubr.f32.gmra.mrb[0].mxu0 %v974
    %v1166 = vpop.f32.mrb[0].mxu0
    %v1167 = vadd.f32 %v1092, %v1166
    %v1168 = vpop.f32.mrb[0].mxu0
    %1169 = vmatprep.mubr.f32.mxu0 0.0
    %1170 = vmatmul.mubr.f32.gmra.mrb[0].mxu0 %v975
    %v1171 = vpop.f32.mrb[0].mxu0
    %v1172 = vadd.f32 %v1097, %v1171
    %v1173 = vpop.f32.mrb[0].mxu0
    %1174 = vdwg.mxu0
    %s1175 = scalar_lea.vmem [#allocation7], 4
    %v1176 = vld [vmem:[%s1175] sm:$0x1]
    %v1178 = vlaneseq
    %v1179 = vshrl.u32 %v1178, 7
    %v1180 = vsub.s32 0, %v1179
    %v1181 = vrot.slane %v1176, %v1180
    %v1183 = vadd.f32 %v1167, %v1181
    %v1184 = vadd.f32 %v1172, %v1181
    %v1185 = vmax.f32 %v1183, 0.0
    %v1186 = vmax.f32 %v1184, 0.0
    %v1189 = vrot.slane %v1185, 7
    %v1190 = vrot.slane %v1186, 7
    %v1193 = vsel %vm64, %v1185, %v1189
    %v1194 = vsel %vm64, %v1186, %v1190
    %v1195 = vrot.slane %v1185, 1
    %v1196 = vrot.slane %v1186, 1
    %v1199 = vsel %vm71, %v1195, %v1185
    %v1200 = vsel %vm71, %v1196, %v1186
    %s1201 = scalar_lea.vmem [#allocation5], 1920
    %v1202 = vld [vmem:[%s1201] sm:$0xff]
    %v1203 = vld [vmem:[%s1201 + $0x8] sm:$0xff]
    %v1204 = vld [vmem:[%s1201 + $0x10] sm:$0xff]
    %v1205 = vld [vmem:[%s1201 + $0x18] sm:$0xff]
    %v1206 = vld [vmem:[%s1201 + $0x20] sm:$0xff]
    %v1207 = vld [vmem:[%s1201 + $0x28] sm:$0xff]
    %v1208 = vld [vmem:[%s1201 + $0x30] sm:$0xff]
    %v1209 = vld [vmem:[%s1201 + $0x38] sm:$0xff]
    %v1210 = vld [vmem:[%s1201 + $0x40] sm:$0xff]
    %v1211 = vld [vmem:[%s1201 + $0x48] sm:$0xff]
    %v1212 = vld [vmem:[%s1201 + $0x50] sm:$0xff]
    %v1213 = vld [vmem:[%s1201 + $0x58] sm:$0xff]
    %v1214 = vld [vmem:[%s1201 + $0x60] sm:$0xff]
    %v1215 = vld [vmem:[%s1201 + $0x68] sm:$0xff]
    %v1216 = vld [vmem:[%s1201 + $0x70] sm:$0xff]
    %v1217 = vld [vmem:[%s1201 + $0x78] sm:$0xff]
    %v1218 = vld [vmem:[%s1201 + $0x80] sm:$0xff]
    %v1219 = vld [vmem:[%s1201 + $0x88] sm:$0xff]
    %v1220 = vld [vmem:[%s1201 + $0x90] sm:$0xff]
    %v1221 = vld [vmem:[%s1201 + $0x98] sm:$0xff]
    %v1222 = vld [vmem:[%s1201 + $0xa0] sm:$0xff]
    %v1223 = vld [vmem:[%s1201 + $0xa8] sm:$0xff]
    %v1224 = vld [vmem:[%s1201 + $0xb0] sm:$0xff]
    %v1225 = vld [vmem:[%s1201 + $0xb8] sm:$0xff]
    %v1226 = vld [vmem:[%s1201 + $0xc0] sm:$0xff]
    %v1227 = vld [vmem:[%s1201 + $0xc8] sm:$0xff]
    %v1228 = vld [vmem:[%s1201 + $0xd0] sm:$0xff]
    %v1229 = vld [vmem:[%s1201 + $0xd8] sm:$0xff]
    %v1230 = vld [vmem:[%s1201 + $0xe0] sm:$0xff]
    %v1231 = vld [vmem:[%s1201 + $0xe8] sm:$0xff]
    %v1232 = vld [vmem:[%s1201 + $0xf0] sm:$0xff]
    %v1233 = vld [vmem:[%s1201 + $0xf8] sm:$0xff]
    %v1234 = vld [vmem:[%s1201 + $0x100] sm:$0xff]
    %v1235 = vld [vmem:[%s1201 + $0x108] sm:$0xff]
    %v1236 = vld [vmem:[%s1201 + $0x110] sm:$0xff]
    %v1237 = vld [vmem:[%s1201 + $0x118] sm:$0xff]
    %v1238 = vld [vmem:[%s1201 + $0x120] sm:$0xff]
    %v1239 = vld [vmem:[%s1201 + $0x128] sm:$0xff]
    %v1240 = vld [vmem:[%s1201 + $0x130] sm:$0xff]
    %v1241 = vld [vmem:[%s1201 + $0x138] sm:$0xff]
    %v1242 = vld [vmem:[%s1201 + $0x140] sm:$0xff]
    %v1243 = vld [vmem:[%s1201 + $0x148] sm:$0xff]
    %v1244 = vld [vmem:[%s1201 + $0x150] sm:$0xff]
    %v1245 = vld [vmem:[%s1201 + $0x158] sm:$0xff]
    %v1246 = vld [vmem:[%s1201 + $0x160] sm:$0xff]
    %v1247 = vld [vmem:[%s1201 + $0x168] sm:$0xff]
    %v1248 = vld [vmem:[%s1201 + $0x170] sm:$0xff]
    %v1249 = vld [vmem:[%s1201 + $0x178] sm:$0xff]
    %1250 = vmatprep.subr.mxu0 0.0
    %1251 = vmatpush1.msra.mxu0 %v1202
    %1252 = vmatprep.subr.mxu0 0.0
    %1253 = vmatpush1.msra.mxu0 %v1203
    %1254 = vmatprep.subr.mxu0 0.0
    %1255 = vmatpush1.msra.mxu0 %v1204
    %1256 = vmatprep.subr.mxu0 0.0
    %1257 = vmatpush1.msra.mxu0 %v1205
    %1258 = vmatprep.subr.mxu0 0.0
    %1259 = vmatpush1.msra.mxu0 %v1206
    %1260 = vmatprep.subr.mxu0 0.0
    %1261 = vmatpush1.msra.mxu0 %v1207
    %1262 = vmatprep.subr.mxu0 0.0
    %1263 = vmatpush1.msra.mxu0 %v1208
    %1264 = vmatprep.subr.mxu0 0.0
    %1265 = vmatpush1.msra.mxu0 %v1209
    %1266 = vmatprep.subr.mxu0 0.0
    %1267 = vmatpush1.msra.mxu0 %v1210
    %1268 = vmatprep.subr.mxu0 0.0
    %1269 = vmatpush1.msra.mxu0 %v1211
    %1270 = vmatprep.subr.mxu0 0.0
    %1271 = vmatpush1.msra.mxu0 %v1212
    %1272 = vmatprep.subr.mxu0 0.0
    %1273 = vmatpush1.msra.mxu0 %v1213
    %1274 = vmatprep.subr.mxu0 0.0
    %1275 = vmatpush1.msra.mxu0 %v1214
    %1276 = vmatprep.subr.mxu0 0.0
    %1277 = vmatpush1.msra.mxu0 %v1215
    %1278 = vmatprep.subr.mxu0 0.0
    %1279 = vmatpush1.msra.mxu0 %v1216
    %1280 = vmatprep.subr.mxu0 0.0
    %1281 = vmatpush1.msra.mxu0 %v1217
    %1282 = vmatprep.subr.mxu0 0.0
    %1283 = vmatpush1.msra.mxu0 %v1218
    %1284 = vmatprep.subr.mxu0 0.0
    %1285 = vmatpush1.msra.mxu0 %v1219
    %1286 = vmatprep.subr.mxu0 0.0
    %1287 = vmatpush1.msra.mxu0 %v1220
    %1288 = vmatprep.subr.mxu0 0.0
    %1289 = vmatpush1.msra.mxu0 %v1221
    %1290 = vmatprep.subr.mxu0 0.0
    %1291 = vmatpush1.msra.mxu0 %v1222
    %1292 = vmatprep.subr.mxu0 0.0
    %1293 = vmatpush1.msra.mxu0 %v1223
    %1294 = vmatprep.subr.mxu0 0.0
    %1295 = vmatpush1.msra.mxu0 %v1224
    %1296 = vmatprep.subr.mxu0 0.0
    %1297 = vmatpush1.msra.mxu0 %v1225
    %1298 = vmatprep.subr.mxu0 0.0
    %1299 = vmatpush1.msra.mxu0 %v1226
    %1300 = vmatprep.subr.mxu0 0.0
    %1301 = vmatpush1.msra.mxu0 %v1227
    %1302 = vmatprep.subr.mxu0 0.0
    %1303 = vmatpush1.msra.mxu0 %v1228
    %1304 = vmatprep.subr.mxu0 0.0
    %1305 = vmatpush1.msra.mxu0 %v1229
    %1306 = vmatprep.subr.mxu0 0.0
    %1307 = vmatpush1.msra.mxu0 %v1230
    %1308 = vmatprep.subr.mxu0 0.0
    %1309 = vmatpush1.msra.mxu0 %v1231
    %1310 = vmatprep.subr.mxu0 0.0
    %1311 = vmatpush1.msra.mxu0 %v1232
    %1312 = vmatprep.subr.mxu0 0.0
    %1313 = vmatpush1.msra.mxu0 %v1233
    %1314 = vmatprep.mubr.f32.mxu0 %v1185
    %1315 = vmatmul.mubr.f32.gmra.mrb[0].mxu0 %v1193
    %v1316 = vpop.f32.mrb[0].mxu0
    %v1317 = vadd.f32 0.0, %v1316
    %v1318 = vpop.f32.mrb[0].mxu0
    %1319 = vmatprep.mubr.f32.mxu0 %v1186
    %1320 = vmatmul.mubr.f32.gmra.mrb[0].mxu0 %v1194
    %v1321 = vpop.f32.mrb[0].mxu0
    %v1322 = vadd.f32 0.0, %v1321
    %v1323 = vpop.f32.mrb[0].mxu0
    %1324 = vdwg.mxu0
    %1325 = vmatprep.subr.mxu0 0.0
    %1326 = vmatpush1.msra.mxu0 %v1234
    %1327 = vmatprep.subr.mxu0 0.0
    %1328 = vmatpush1.msra.mxu0 %v1235
    %1329 = vmatprep.subr.mxu0 0.0
    %1330 = vmatpush1.msra.mxu0 %v1236
    %1331 = vmatprep.subr.mxu0 0.0
    %1332 = vmatpush1.msra.mxu0 %v1237
    %1333 = vmatprep.subr.mxu0 0.0
    %1334 = vmatpush1.msra.mxu0 %v1238
    %1335 = vmatprep.subr.mxu0 0.0
    %1336 = vmatpush1.msra.mxu0 %v1239
    %1337 = vmatprep.subr.mxu0 0.0
    %1338 = vmatpush1.msra.mxu0 %v1240
    %1339 = vmatprep.subr.mxu0 0.0
    %1340 = vmatpush1.msra.mxu0 %v1241
    %1341 = vmatprep.subr.mxu0 0.0
    %1342 = vmatpush1.msra.mxu0 %v1242
    %1343 = vmatprep.subr.mxu0 0.0
    %1344 = vmatpush1.msra.mxu0 %v1243
    %1345 = vmatprep.subr.mxu0 0.0
    %1346 = vmatpush1.msra.mxu0 %v1244
    %1347 = vmatprep.subr.mxu0 0.0
    %1348 = vmatpush1.msra.mxu0 %v1245
    %1349 = vmatprep.subr.mxu0 0.0
    %1350 = vmatpush1.msra.mxu0 %v1246
    %1351 = vmatprep.subr.mxu0 0.0
    %1352 = vmatpush1.msra.mxu0 %v1247
    %1353 = vmatprep.subr.mxu0 0.0
    %1354 = vmatpush1.msra.mxu0 %v1248
    %1355 = vmatprep.subr.mxu0 0.0
    %1356 = vmatpush1.msra.mxu0 %v1249
    %1357 = vmatprep.subr.mxu0 0.0
    %1358 = vmatpush1.msra.mxu0 0.0
    %1359 = vmatprep.subr.mxu0 0.0
    %1360 = vmatpush1.msra.mxu0 0.0
    %1361 = vmatprep.subr.mxu0 0.0
    %1362 = vmatpush1.msra.mxu0 0.0
    %1363 = vmatprep.subr.mxu0 0.0
    %1364 = vmatpush1.msra.mxu0 0.0
    %1365 = vmatprep.subr.mxu0 0.0
    %1366 = vmatpush1.msra.mxu0 0.0
    %1367 = vmatprep.subr.mxu0 0.0
    %1368 = vmatpush1.msra.mxu0 0.0
    %1369 = vmatprep.subr.mxu0 0.0
    %1370 = vmatpush1.msra.mxu0 0.0
    %1371 = vmatprep.subr.mxu0 0.0
    %1372 = vmatpush1.msra.mxu0 0.0
    %1373 = vmatprep.subr.mxu0 0.0
    %1374 = vmatpush1.msra.mxu0 0.0
    %1375 = vmatprep.subr.mxu0 0.0
    %1376 = vmatpush1.msra.mxu0 0.0
    %1377 = vmatprep.subr.mxu0 0.0
    %1378 = vmatpush1.msra.mxu0 0.0
    %1379 = vmatprep.subr.mxu0 0.0
    %1380 = vmatpush1.msra.mxu0 0.0
    %1381 = vmatprep.subr.mxu0 0.0
    %1382 = vmatpush1.msra.mxu0 0.0
    %1383 = vmatprep.subr.mxu0 0.0
    %1384 = vmatpush1.msra.mxu0 0.0
    %1385 = vmatprep.subr.mxu0 0.0
    %1386 = vmatpush1.msra.mxu0 0.0
    %1387 = vmatprep.subr.mxu0 0.0
    %1388 = vmatpush1.msra.mxu0 0.0
    %1389 = vmatprep.mubr.f32.mxu0 0.0
    %1390 = vmatmul.mubr.f32.gmra.mrb[0].mxu0 %v1199
    %v1391 = vpop.f32.mrb[0].mxu0
    %v1392 = vadd.f32 %v1317, %v1391
    %v1393 = vpop.f32.mrb[0].mxu0
    %1394 = vmatprep.mubr.f32.mxu0 0.0
    %1395 = vmatmul.mubr.f32.gmra.mrb[0].mxu0 %v1200
    %v1396 = vpop.f32.mrb[0].mxu0
    %v1397 = vadd.f32 %v1322, %v1396
    %v1398 = vpop.f32.mrb[0].mxu0
    %1399 = vdwg.mxu0
    %v1400 = vadd.f32 %v960, %v1392
    %v1401 = vadd.f32 %v961, %v1397
    %s1402 = scalar_lea.vmem [#allocation7], 5
    %v1403 = vld [vmem:[%s1402] sm:$0x1]
    %v1405 = vlaneseq
    %v1406 = vshrl.u32 %v1405, 7
    %v1407 = vsub.s32 0, %v1406
    %v1408 = vrot.slane %v1403, %v1407
    %v1410 = vadd.f32 %v1400, %v1408
    %v1411 = vadd.f32 %v1401, %v1408
    %v1412 = vmax.f32 %v1410, 0.0
    %v1413 = vmax.f32 %v1411, 0.0
    %1414 = vst [vmem:[#allocation8] sm:$0xff] %v1412
    %1415 = vst [vmem:[#allocation8 + $0x8] sm:$0xff] %v1413
    // Predicated region
    $region26: #{tpu_custom_call.1} parent=1 // pred_check
      _
    $region27: #{tpu_custom_call.1} parent=1 // pred_check_branch
      %1417 = sbr.rel (0) target = $region29
    $region28: #{tpu_custom_call.1} parent=1 // pred_region
      %s1419 = ssub.s32 256, 256
      %1420 = vsyncadd [#allocation4], %s1419
      %s1421 = sshll.u32 [#allocation8], 4
      %s1422 = int_to_ptr.vmem [resolvable:$true] %s1421
      %1427 = dma.vmem_to_hbm [thread:$0]  %s1422, 256, %s3, [#allocation4], 128, 128, 8
    $region29: #{tpu_custom_call.1} parent=1 // pred_fallthru
      _
    // Predicated region
    $region30: #{tpu_custom_call.1} parent=1 // pred_check
      _
    $region31: #{tpu_custom_call.1} parent=1 // pred_check_branch
      %1429 = sbr.rel (0) target = $region33
    $region32: #{tpu_custom_call.1} parent=1 // pred_region
      %1430 = dma.done [#allocation4], 256
    $region33: #{tpu_custom_call.1} parent=1 // pred_fallthru
      _
    %1431 = vsyncpa [#allocation3], 1
    %1432 = vsyncpa [#allocation6], 1
    %1433 = vsyncpa [#allocation4], 1

</llo_original>
